<compile_context>
chip_gen: v5e
topology: v5e:2x2
jax: 0.10.0
libtpu: 0.0.40
codegen_flags: <defaults>
</compile_context>

<pallas_src>
import functools

import jax
import jax.numpy as jnp
import numpy as np
from jax.experimental import pallas as pl
from jax.experimental.pallas import tpu as pltpu


def _resblock_kernel(xpad_ref, w1_ref, b1_ref, w2_ref, b2_ref, o_ref,
                     *, H, W, C, TM):
    """One grid step = one TM-row strip of one image.

    xpad_ref : (1, H+4, W+2, C) f32   NHWC input, pre-padded 2 rows / 1 col
    w1_ref   : (9*C, C)         bf16  conv1 weights, rows ordered (ky, kx, cin)
    b1_ref   : (1, C)           f32   conv1 bias
    w2_ref   : (9*C, C)         bf16  conv2 weights
    b2_ref   : (1, C)           f32   conv2 bias
    o_ref    : (1, TM*W, C)           strip of the (N, H*W, C) output
    """
    s = pl.program_id(1)
    row0 = pl.multiple_of(s * TM, TM)        # first output row of this strip
    HW1 = (TM + 2) * W                       # conv1 rows incl. 1-row h1 halo

    # ---- conv1: strip-local im2col -> one MXU matmul -----------------------
    # h1 row q (q = row0-1 .. row0+TM) needs padded-input rows row0+i+ky.
    taps1 = []
    for ky in range(3):
        for kx in range(3):
            t = xpad_ref[0, pl.ds(row0 + ky, TM + 2), kx:kx + W, :]
            taps1.append(t.reshape(HW1, C).astype(jnp.bfloat16))
    p1 = jnp.concatenate(taps1, axis=-1)                      # (HW1, 9C) bf16
    h1 = jnp.dot(p1, w1_ref[...], preferred_element_type=jnp.float32)
    h1 = jnp.maximum(h1 + b1_ref[...], 0.0)                   # f32, ReLU
    h1 = h1.reshape(TM + 2, W, C)

    # Halo rows outside the image are conv2's zero padding, not conv1 output.
    row_ids = jax.lax.broadcasted_iota(jnp.int32, (TM + 2, W, C), 0) + (row0 - 1)
    h1 = jnp.where((row_ids >= 0) & (row_ids < H), h1, 0.0)

    # Strip-local zero pad along W (two (TM+2,1,C) columns only).
    zc = jnp.zeros((TM + 2, 1, C), jnp.float32)
    h1p = jnp.concatenate([zc, h1, zc], axis=1)               # (TM+2, W+2, C)

    # ---- conv2: strip-local im2col -> one MXU matmul (no ReLU) --------------
    taps2 = [
        h1p[ky:ky + TM, kx:kx + W, :].reshape(TM * W, C).astype(jnp.bfloat16)
        for ky in range(3) for kx in range(3)
    ]
    p2 = jnp.concatenate(taps2, axis=-1)                      # (TM*W, 9C) bf16
    h2 = jnp.dot(p2, w2_ref[...], preferred_element_type=jnp.float32)
    h2 = h2 + b2_ref[...]                                     # (TM*W, C) f32

    # ---- residual: re-slice the centre tap from VMEM-resident xpad ---------
    res = xpad_ref[0, pl.ds(row0 + 2, TM), 1:1 + W, :].reshape(TM * W, C)
    o_ref[0] = (h2 + res).astype(o_ref.dtype)


def _choose_strip_rows(H, W, C):
    """Strip height: a divisor of H that is a multiple of 8 (or H itself),
    aiming for >= ~512 im2col rows per matmul while keeping the per-strip
    bf16 patch matrix under ~4 MiB."""
    divisors = [t for t in range(1, H + 1) if H % t == 0]
    valid = [t for t in divisors if t % 8 == 0] or [H]

    def patch_bytes(t):          # conv1 patch matrix (the larger of the two)
        return (t + 2) * W * 9 * C * 2

    best = valid[0]
    for t in valid:              # increasing
        if patch_bytes(t) <= (4 << 20):
            best = t
            if t * W >= 512:
                break
    return best


def resblock_forward(x_nchw, w1, b1, w2, b2, *, strip_rows=None):
    """ResBlock forward. x_nchw: (N, C, H, W); w*: (C, C, 3, 3); b*: (C,)."""
    N, C, H, W = x_nchw.shape
    if w1.shape != (C, C, 3, 3) or w2.shape != (C, C, 3, 3):
        raise ValueError(
            "ResBlock requires in_channels == out_channels with 3x3 kernels; "
            f"got x channels {C}, w1 {w1.shape}, w2 {w2.shape}")

    if strip_rows is None:
        TM = _choose_strip_rows(H, W, C)
    else:
        TM = int(strip_rows)
        if H % TM != 0 or not (TM % 8 == 0 or TM == H):
            raise ValueError(f"strip_rows={TM} must divide H={H} and be a "
                             "multiple of 8 (or equal H)")
    S = H // TM

    # NCHW -> NHWC; pad 2 rows (conv1 halo + conv2's h1 halo) and 1 column.
    x = jnp.transpose(x_nchw, (0, 2, 3, 1))
    xpad = jnp.pad(x, ((0, 0), (2, 2), (1, 1), (0, 0)))

    # OIHW -> (ky, kx, Cin, Cout) -> (9*Cin, Cout), bf16 for the MXU.
    w1k = jnp.transpose(w1, (2, 3, 1, 0)).reshape(9 * C, C).astype(jnp.bfloat16)
    w2k = jnp.transpose(w2, (2, 3, 1, 0)).reshape(9 * C, C).astype(jnp.bfloat16)
    b1k = b1.reshape(1, C).astype(jnp.float32)
    b2k = b2.reshape(1, C).astype(jnp.float32)

    # VMEM budget from the actual block sizes (double-buffered input/output,
    # both weight buffers, strip-local temporaries) + margin; capped at 48 MiB
    # to leave headroom under v7x's 64 MiB physical VMEM.
    f32 = 4
    in_blk = (H + 4) * (W + 2) * C * f32
    out_blk = TM * W * C * f32
    wgt = 2 * (9 * C * C * 2 + C * f32)
    tmp = (2 * (TM + 2) * W * 9 * C * 2            # p1 + taps copies (bf16)
           + 2 * (TM + 2) * (W + 2) * C * f32      # h1 / h1p (f32)
           + TM * W * 9 * C * 2)                   # p2 (bf16)
    need = 2 * (in_blk + out_blk + wgt) + tmp + (4 << 20)
    vmem_limit = int(min(max(need, 32 << 20), 48 << 20))

    kernel = functools.partial(_resblock_kernel, H=H, W=W, C=C, TM=TM)

    out_flat = pl.pallas_call(
        kernel,
        out_shape=jax.ShapeDtypeStruct((N, H * W, C), x.dtype),
        grid_spec=pltpu.PrefetchScalarGridSpec(
            num_scalar_prefetch=0,
            grid=(N, S),
            in_specs=[
                # Full padded image per batch element; constant in the strip
                # index, so it is DMA'd once per image and reused by strips.
                pl.BlockSpec((1, H + 4, W + 2, C), lambda n, s: (n, 0, 0, 0)),
                # Grid-invariant weights/biases (fetched once).
                # NOTE: pipeline_mode=pl.Buffered(1) would drop their second
                # buffer (~0.6 MB at C=128); omitted to stay on the verified
                # lowering path — the VMEM estimate budgets both buffers.
                pl.BlockSpec((9 * C, C), lambda n, s: (0, 0)),
                pl.BlockSpec((1, C), lambda n, s: (0, 0)),
                pl.BlockSpec((9 * C, C), lambda n, s: (0, 0)),
                pl.BlockSpec((1, C), lambda n, s: (0, 0)),
            ],
            out_specs=pl.BlockSpec((1, TM * W, C), lambda n, s: (n, s, 0)),
        ),
        compiler_params=pltpu.CompilerParams(
            dimension_semantics=("parallel", "parallel"),
            vmem_limit_bytes=vmem_limit,
        ),
    )(xpad, w1k, b1k, w2k, b2k)

    # (N, H*W, C) -> NHWC -> NCHW
    out_nhwc = out_flat.reshape(N, H, W, C)
    return jnp.transpose(out_nhwc, (0, 3, 1, 2))


def _reference_forward(x, w1, b1, w2, b2):
    """Plain-JAX reference identical to the PyTorch ResBlock (NCHW, f32)."""
    dn = ('NCHW', 'OIHW', 'NCHW')
    y = jax.lax.conv_general_dilated(x, w1, (1, 1), ((1, 1), (1, 1)),
                                     dimension_numbers=dn)
    y = jax.nn.relu(y + b1[None, :, None, None])
    z = jax.lax.conv_general_dilated(y, w2, (1, 1), ((1, 1), (1, 1)),
                                     dimension_numbers=dn)
    z = z + b2[None, :, None, None]
    return z + x


if __name__ == "__main__":
    N, C, H, W = 2, 4, 16, 16          # in_channel == out_channel for residual
    key = jax.random.PRNGKey(0)
    kx_, kw1, kb1, kw2, kb2 = jax.random.split(key, 5)

    # Deterministic parameter init (PyTorch-style uniform bound = 1/sqrt(fan_in))
    fan_in = C * 3 * 3
    bound = 1.0 / np.sqrt(fan_in)
    x = jax.random.normal(kx_, (N, C, H, W), dtype=jnp.float32)
    w1 = jax.random.uniform(kw1, (C, C, 3, 3), jnp.float32, -bound, bound)
    b1 = jax.random.uniform(kb1, (C,), jnp.float32, -bound, bound)
    w2 = jax.random.uniform(kw2, (C, C, 3, 3), jnp.float32, -bound, bound)
    b2 = jax.random.uniform(kb2, (C,), jnp.float32, -bound, bound)

    # strip_rows=8 -> 2 row strips per image: exercises the strip grid axis,
    # the recomputed h1 halo and the top/bottom boundary masking.
    out = resblock_forward(x, w1, b1, w2, b2, strip_rows=8)
    out = jax.block_until_ready(out)

    ref = jax.block_until_ready(_reference_forward(x, w1, b1, w2, b2))
    # bf16 MXU operands with f32 accumulation -> loosened (but tight) tolerance.
    np.testing.assert_allclose(np.asarray(out), np.asarray(ref),
                               rtol=2e-2, atol=2e-2)
    print("KERNEL_OK")
</pallas_src>

<mosaic_0001>
module attributes {stable_mosaic.version = 11 : i64} {
  func.func @_resblock_kernel(%arg0: i32, %arg1: i32, %arg2: memref<1x20x18x4xf32, #tpu.memory_space<vmem>>, %arg3: memref<36x4xbf16, #tpu.memory_space<vmem>>, %arg4: memref<1x4xf32, #tpu.memory_space<vmem>>, %arg5: memref<36x4xbf16, #tpu.memory_space<vmem>>, %arg6: memref<1x4xf32, #tpu.memory_space<vmem>>, %arg7: memref<1x128x4xf32, #tpu.memory_space<vmem>>) attributes {dimension_semantics = [#tpu.dimension_semantics<parallel>, #tpu.dimension_semantics<parallel>], iteration_bounds = array<i64: 2, 2>, scalar_prefetch = 0 : i64, scratch_operands = 0 : i64, tpu.core_type = #tpu.core_type<tc>, window_params = [{transform_indices = @transform_0, window_bounds = array<i64: 1, 20, 18, 4>}, {pipeline_mode = #tpu.pipeline_mode<synchronous>, transform_indices = @transform_1, window_bounds = array<i64: 36, 4>}, {pipeline_mode = #tpu.pipeline_mode<synchronous>, transform_indices = @transform_2, window_bounds = array<i64: 1, 4>}, {pipeline_mode = #tpu.pipeline_mode<synchronous>, transform_indices = @transform_3, window_bounds = array<i64: 36, 4>}, {pipeline_mode = #tpu.pipeline_mode<synchronous>, transform_indices = @transform_4, window_bounds = array<i64: 1, 4>}, {transform_indices = @transform_5, window_bounds = array<i64: 1, 128, 4>}]} {
    %c8_i32 = arith.constant 8 : i32
    %0 = arith.muli %arg1, %c8_i32 : i32
    %1 = tpu.assume_multiple %0, 8 : i32
    %c0_i32 = arith.constant 0 : i32
    %2 = arith.addi %1, %c0_i32 : i32
    %c0 = arith.constant 0 : index
    %3 = arith.index_cast %2 : i32 to index
    %c0_0 = arith.constant 0 : index
    %c0_1 = arith.constant 0 : index
    %4 = vector.load %arg2[%c0, %3, %c0_0, %c0_1] : memref<1x20x18x4xf32, #tpu.memory_space<vmem>>, vector<1x10x16x4xf32>
    %5 = vector.shape_cast %4 : vector<1x10x16x4xf32> to vector<10x16x4xf32>
    %6 = vector.shape_cast %5 : vector<10x16x4xf32> to vector<160x4xf32>
    %7 = arith.truncf %6 : vector<160x4xf32> to vector<160x4xbf16>
    %c0_i32_2 = arith.constant 0 : i32
    %8 = arith.addi %1, %c0_i32_2 : i32
    %c0_3 = arith.constant 0 : index
    %9 = arith.index_cast %8 : i32 to index
    %c1 = arith.constant 1 : index
    %c0_4 = arith.constant 0 : index
    %10 = vector.load %arg2[%c0_3, %9, %c1, %c0_4] : memref<1x20x18x4xf32, #tpu.memory_space<vmem>>, vector<1x10x16x4xf32>
    %11 = vector.shape_cast %10 : vector<1x10x16x4xf32> to vector<10x16x4xf32>
    %12 = vector.shape_cast %11 : vector<10x16x4xf32> to vector<160x4xf32>
    %13 = arith.truncf %12 : vector<160x4xf32> to vector<160x4xbf16>
    %c0_i32_5 = arith.constant 0 : i32
    %14 = arith.addi %1, %c0_i32_5 : i32
    %c0_6 = arith.constant 0 : index
    %15 = arith.index_cast %14 : i32 to index
    %c2 = arith.constant 2 : index
    %c0_7 = arith.constant 0 : index
    %16 = vector.load %arg2[%c0_6, %15, %c2, %c0_7] : memref<1x20x18x4xf32, #tpu.memory_space<vmem>>, vector<1x10x16x4xf32>
    %17 = vector.shape_cast %16 : vector<1x10x16x4xf32> to vector<10x16x4xf32>
    %18 = vector.shape_cast %17 : vector<10x16x4xf32> to vector<160x4xf32>
    %19 = arith.truncf %18 : vector<160x4xf32> to vector<160x4xbf16>
    %c1_i32 = arith.constant 1 : i32
    %20 = arith.addi %1, %c1_i32 : i32
    %c0_8 = arith.constant 0 : index
    %21 = arith.index_cast %20 : i32 to index
    %c0_9 = arith.constant 0 : index
    %c0_10 = arith.constant 0 : index
    %22 = vector.load %arg2[%c0_8, %21, %c0_9, %c0_10] : memref<1x20x18x4xf32, #tpu.memory_space<vmem>>, vector<1x10x16x4xf32>
    %23 = vector.shape_cast %22 : vector<1x10x16x4xf32> to vector<10x16x4xf32>
    %24 = vector.shape_cast %23 : vector<10x16x4xf32> to vector<160x4xf32>
    %25 = arith.truncf %24 : vector<160x4xf32> to vector<160x4xbf16>
    %c1_i32_11 = arith.constant 1 : i32
    %26 = arith.addi %1, %c1_i32_11 : i32
    %c0_12 = arith.constant 0 : index
    %27 = arith.index_cast %26 : i32 to index
    %c1_13 = arith.constant 1 : index
    %c0_14 = arith.constant 0 : index
    %28 = vector.load %arg2[%c0_12, %27, %c1_13, %c0_14] : memref<1x20x18x4xf32, #tpu.memory_space<vmem>>, vector<1x10x16x4xf32>
    %29 = vector.shape_cast %28 : vector<1x10x16x4xf32> to vector<10x16x4xf32>
    %30 = vector.shape_cast %29 : vector<10x16x4xf32> to vector<160x4xf32>
    %31 = arith.truncf %30 : vector<160x4xf32> to vector<160x4xbf16>
    %c1_i32_15 = arith.constant 1 : i32
    %32 = arith.addi %1, %c1_i32_15 : i32
    %c0_16 = arith.constant 0 : index
    %33 = arith.index_cast %32 : i32 to index
    %c2_17 = arith.constant 2 : index
    %c0_18 = arith.constant 0 : index
    %34 = vector.load %arg2[%c0_16, %33, %c2_17, %c0_18] : memref<1x20x18x4xf32, #tpu.memory_space<vmem>>, vector<1x10x16x4xf32>
    %35 = vector.shape_cast %34 : vector<1x10x16x4xf32> to vector<10x16x4xf32>
    %36 = vector.shape_cast %35 : vector<10x16x4xf32> to vector<160x4xf32>
    %37 = arith.truncf %36 : vector<160x4xf32> to vector<160x4xbf16>
    %c2_i32 = arith.constant 2 : i32
    %38 = arith.addi %1, %c2_i32 : i32
    %c0_19 = arith.constant 0 : index
    %39 = arith.index_cast %38 : i32 to index
    %c0_20 = arith.constant 0 : index
    %c0_21 = arith.constant 0 : index
    %40 = vector.load %arg2[%c0_19, %39, %c0_20, %c0_21] : memref<1x20x18x4xf32, #tpu.memory_space<vmem>>, vector<1x10x16x4xf32>
    %41 = vector.shape_cast %40 : vector<1x10x16x4xf32> to vector<10x16x4xf32>
    %42 = vector.shape_cast %41 : vector<10x16x4xf32> to vector<160x4xf32>
    %43 = arith.truncf %42 : vector<160x4xf32> to vector<160x4xbf16>
    %c2_i32_22 = arith.constant 2 : i32
    %44 = arith.addi %1, %c2_i32_22 : i32
    %c0_23 = arith.constant 0 : index
    %45 = arith.index_cast %44 : i32 to index
    %c1_24 = arith.constant 1 : index
    %c0_25 = arith.constant 0 : index
    %46 = vector.load %arg2[%c0_23, %45, %c1_24, %c0_25] : memref<1x20x18x4xf32, #tpu.memory_space<vmem>>, vector<1x10x16x4xf32>
    %47 = vector.shape_cast %46 : vector<1x10x16x4xf32> to vector<10x16x4xf32>
    %48 = vector.shape_cast %47 : vector<10x16x4xf32> to vector<160x4xf32>
    %49 = arith.truncf %48 : vector<160x4xf32> to vector<160x4xbf16>
    %c2_i32_26 = arith.constant 2 : i32
    %50 = arith.addi %1, %c2_i32_26 : i32
    %c0_27 = arith.constant 0 : index
    %51 = arith.index_cast %50 : i32 to index
    %c2_28 = arith.constant 2 : index
    %c0_29 = arith.constant 0 : index
    %52 = vector.load %arg2[%c0_27, %51, %c2_28, %c0_29] : memref<1x20x18x4xf32, #tpu.memory_space<vmem>>, vector<1x10x16x4xf32>
    %53 = vector.shape_cast %52 : vector<1x10x16x4xf32> to vector<10x16x4xf32>
    %54 = vector.shape_cast %53 : vector<10x16x4xf32> to vector<160x4xf32>
    %55 = arith.truncf %54 : vector<160x4xf32> to vector<160x4xbf16>
    %56 = tpu.concatenate %7, %13, %19, %25, %31, %37, %43, %49, %55 in 1 : vector<160x4xbf16>, vector<160x4xbf16>, vector<160x4xbf16>, vector<160x4xbf16>, vector<160x4xbf16>, vector<160x4xbf16>, vector<160x4xbf16>, vector<160x4xbf16>, vector<160x4xbf16> -> vector<160x36xbf16>
    %c0_30 = arith.constant 0 : index
    %c0_31 = arith.constant 0 : index
    %57 = vector.load %arg3[%c0_30, %c0_31] : memref<36x4xbf16, #tpu.memory_space<vmem>>, vector<36x4xbf16>
    %cst = arith.constant dense<0.000000e+00> : vector<160x4xf32>
    %58 = tpu.matmul %56, %57, %cst {dimension_numbers = #tpu.dot_dimension_numbers<[1], [0], [0], [1], [0, 0, 1, 1], [], []>} : vector<160x36xbf16>, vector<36x4xbf16>, vector<160x4xf32> -> vector<160x4xf32>
    %c0_32 = arith.constant 0 : index
    %c0_33 = arith.constant 0 : index
    %59 = vector.load %arg4[%c0_32, %c0_33] : memref<1x4xf32, #tpu.memory_space<vmem>>, vector<1x4xf32>
    %60 = vector.broadcast %59 : vector<1x4xf32> to vector<160x4xf32>
    %61 = arith.addf %58, %60 : vector<160x4xf32>
    %cst_34 = arith.constant 0.000000e+00 : f32
    %62 = vector.broadcast %cst_34 : f32 to vector<160x4xf32>
    %63 = arith.maximumf %61, %62 : vector<160x4xf32>
    %64 = vector.shape_cast %63 : vector<160x4xf32> to vector<10x16x4xf32>
    %65 = tpu.iota {dimensions = array<i32: 0>} : vector<10x16x4xi32>
    %c1_i32_35 = arith.constant 1 : i32
    %66 = arith.subi %1, %c1_i32_35 : i32
    %67 = vector.broadcast %66 : i32 to vector<10x16x4xi32>
    %68 = arith.addi %65, %67 : vector<10x16x4xi32>
    %c0_i32_36 = arith.constant 0 : i32
    %69 = vector.broadcast %c0_i32_36 : i32 to vector<10x16x4xi32>
    %70 = arith.cmpi sge, %68, %69 : vector<10x16x4xi32>
    %c16_i32 = arith.constant 16 : i32
    %71 = vector.broadcast %c16_i32 : i32 to vector<10x16x4xi32>
    %72 = arith.cmpi slt, %68, %71 : vector<10x16x4xi32>
    %73 = arith.andi %70, %72 : vector<10x16x4xi1>
    %cst_37 = arith.constant 0.000000e+00 : f32
    %74 = vector.broadcast %cst_37 : f32 to vector<10x16x4xf32>
    %75 = arith.select %73, %64, %74 : vector<10x16x4xi1>, vector<10x16x4xf32>
    %cst_38 = arith.constant 0.000000e+00 : f32
    %76 = vector.broadcast %cst_38 : f32 to vector<10x1x4xf32>
    %77 = tpu.concatenate %76, %75, %76 in 1 : vector<10x1x4xf32>, vector<10x16x4xf32>, vector<10x1x4xf32> -> vector<10x18x4xf32>
    %78 = vector.extract_strided_slice %77 {offsets = [0, 0, 0], sizes = [8, 16, 4], strides = [1, 1, 1]} : vector<10x18x4xf32> to vector<8x16x4xf32>
    %79 = vector.shape_cast %78 : vector<8x16x4xf32> to vector<128x4xf32>
    %80 = arith.truncf %79 : vector<128x4xf32> to vector<128x4xbf16>
    %81 = vector.extract_strided_slice %77 {offsets = [0, 1, 0], sizes = [8, 16, 4], strides = [1, 1, 1]} : vector<10x18x4xf32> to vector<8x16x4xf32>
    %82 = vector.shape_cast %81 : vector<8x16x4xf32> to vector<128x4xf32>
    %83 = arith.truncf %82 : vector<128x4xf32> to vector<128x4xbf16>
    %84 = vector.extract_strided_slice %77 {offsets = [0, 2, 0], sizes = [8, 16, 4], strides = [1, 1, 1]} : vector<10x18x4xf32> to vector<8x16x4xf32>
    %85 = vector.shape_cast %84 : vector<8x16x4xf32> to vector<128x4xf32>
    %86 = arith.truncf %85 : vector<128x4xf32> to vector<128x4xbf16>
    %87 = vector.extract_strided_slice %77 {offsets = [1, 0, 0], sizes = [8, 16, 4], strides = [1, 1, 1]} : vector<10x18x4xf32> to vector<8x16x4xf32>
    %88 = vector.shape_cast %87 : vector<8x16x4xf32> to vector<128x4xf32>
    %89 = arith.truncf %88 : vector<128x4xf32> to vector<128x4xbf16>
    %90 = vector.extract_strided_slice %77 {offsets = [1, 1, 0], sizes = [8, 16, 4], strides = [1, 1, 1]} : vector<10x18x4xf32> to vector<8x16x4xf32>
    %91 = vector.shape_cast %90 : vector<8x16x4xf32> to vector<128x4xf32>
    %92 = arith.truncf %91 : vector<128x4xf32> to vector<128x4xbf16>
    %93 = vector.extract_strided_slice %77 {offsets = [1, 2, 0], sizes = [8, 16, 4], strides = [1, 1, 1]} : vector<10x18x4xf32> to vector<8x16x4xf32>
    %94 = vector.shape_cast %93 : vector<8x16x4xf32> to vector<128x4xf32>
    %95 = arith.truncf %94 : vector<128x4xf32> to vector<128x4xbf16>
    %96 = vector.extract_strided_slice %77 {offsets = [2, 0, 0], sizes = [8, 16, 4], strides = [1, 1, 1]} : vector<10x18x4xf32> to vector<8x16x4xf32>
    %97 = vector.shape_cast %96 : vector<8x16x4xf32> to vector<128x4xf32>
    %98 = arith.truncf %97 : vector<128x4xf32> to vector<128x4xbf16>
    %99 = vector.extract_strided_slice %77 {offsets = [2, 1, 0], sizes = [8, 16, 4], strides = [1, 1, 1]} : vector<10x18x4xf32> to vector<8x16x4xf32>
    %100 = vector.shape_cast %99 : vector<8x16x4xf32> to vector<128x4xf32>
    %101 = arith.truncf %100 : vector<128x4xf32> to vector<128x4xbf16>
    %102 = vector.extract_strided_slice %77 {offsets = [2, 2, 0], sizes = [8, 16, 4], strides = [1, 1, 1]} : vector<10x18x4xf32> to vector<8x16x4xf32>
    %103 = vector.shape_cast %102 : vector<8x16x4xf32> to vector<128x4xf32>
    %104 = arith.truncf %103 : vector<128x4xf32> to vector<128x4xbf16>
    %105 = tpu.concatenate %80, %83, %86, %89, %92, %95, %98, %101, %104 in 1 : vector<128x4xbf16>, vector<128x4xbf16>, vector<128x4xbf16>, vector<128x4xbf16>, vector<128x4xbf16>, vector<128x4xbf16>, vector<128x4xbf16>, vector<128x4xbf16>, vector<128x4xbf16> -> vector<128x36xbf16>
    %c0_39 = arith.constant 0 : index
    %c0_40 = arith.constant 0 : index
    %106 = vector.load %arg5[%c0_39, %c0_40] : memref<36x4xbf16, #tpu.memory_space<vmem>>, vector<36x4xbf16>
    %cst_41 = arith.constant dense<0.000000e+00> : vector<128x4xf32>
    %107 = tpu.matmul %105, %106, %cst_41 {dimension_numbers = #tpu.dot_dimension_numbers<[1], [0], [0], [1], [0, 0, 1, 1], [], []>} : vector<128x36xbf16>, vector<36x4xbf16>, vector<128x4xf32> -> vector<128x4xf32>
    %c0_42 = arith.constant 0 : index
    %c0_43 = arith.constant 0 : index
    %108 = vector.load %arg6[%c0_42, %c0_43] : memref<1x4xf32, #tpu.memory_space<vmem>>, vector<1x4xf32>
    %109 = vector.broadcast %108 : vector<1x4xf32> to vector<128x4xf32>
    %110 = arith.addf %107, %109 : vector<128x4xf32>
    %c2_i32_44 = arith.constant 2 : i32
    %111 = arith.addi %1, %c2_i32_44 : i32
    %c0_45 = arith.constant 0 : index
    %112 = arith.index_cast %111 : i32 to index
    %c1_46 = arith.constant 1 : index
    %c0_47 = arith.constant 0 : index
    %113 = vector.load %arg2[%c0_45, %112, %c1_46, %c0_47] : memref<1x20x18x4xf32, #tpu.memory_space<vmem>>, vector<1x8x16x4xf32>
    %114 = vector.shape_cast %113 : vector<1x8x16x4xf32> to vector<8x16x4xf32>
    %115 = vector.shape_cast %114 : vector<8x16x4xf32> to vector<128x4xf32>
    %116 = arith.addf %110, %115 : vector<128x4xf32>
    %c0_48 = arith.constant 0 : index
    %c0_49 = arith.constant 0 : index
    %c0_50 = arith.constant 0 : index
    %117 = vector.load %arg7[%c0_48, %c0_49, %c0_50] : memref<1x128x4xf32, #tpu.memory_space<vmem>>, vector<1x128x4xf32>
    %118 = vector.shape_cast %117 : vector<1x128x4xf32> to vector<128x4xf32>
    %119 = vector.shape_cast %116 : vector<128x4xf32> to vector<1x128x4xf32>
    tpu.vector_store %arg7[%c0_48, %c0_49, %c0_50], %119 {strides = array<i32>} : memref<1x128x4xf32, #tpu.memory_space<vmem>>, vector<1x128x4xf32>,
    return
  }
  func.func @transform_0(%arg0: i32, %arg1: i32) -> (i32, i32, i32, i32) {
    %c0_i32 = arith.constant 0 : i32
    %c0_i32_0 = arith.constant 0 : i32
    %c0_i32_1 = arith.constant 0 : i32
    %c0_i32_2 = arith.constant 0 : i32
    return %arg0, %c0_i32, %c0_i32_0, %c0_i32_1 : i32, i32, i32, i32
  }
  func.func @transform_1(%arg0: i32, %arg1: i32) -> (i32, i32) {
    %c0_i32 = arith.constant 0 : i32
    %c0_i32_0 = arith.constant 0 : i32
    %c0_i32_1 = arith.constant 0 : i32
    return %c0_i32, %c0_i32_0 : i32, i32
  }
  func.func @transform_2(%arg0: i32, %arg1: i32) -> (i32, i32) {
    %c0_i32 = arith.constant 0 : i32
    %c0_i32_0 = arith.constant 0 : i32
    %c0_i32_1 = arith.constant 0 : i32
    return %c0_i32, %c0_i32_0 : i32, i32
  }
  func.func @transform_3(%arg0: i32, %arg1: i32) -> (i32, i32) {
    %c0_i32 = arith.constant 0 : i32
    %c0_i32_0 = arith.constant 0 : i32
    %c0_i32_1 = arith.constant 0 : i32
    return %c0_i32, %c0_i32_0 : i32, i32
  }
  func.func @transform_4(%arg0: i32, %arg1: i32) -> (i32, i32) {
    %c0_i32 = arith.constant 0 : i32
    %c0_i32_0 = arith.constant 0 : i32
    %c0_i32_1 = arith.constant 0 : i32
    return %c0_i32, %c0_i32_0 : i32, i32
  }
  func.func @transform_5(%arg0: i32, %arg1: i32) -> (i32, i32, i32) {
    %c0_i32 = arith.constant 0 : i32
    %c0_i32_0 = arith.constant 0 : i32
    return %arg0, %arg1, %c0_i32 : i32, i32, i32
  }
}

</mosaic_0001>

<llo_original>
// kernel: tpu_custom_call.1
$region0: #{tpu_custom_call.1}
  #allocation0 [shape = 'u32[]', space=smem, size = 0x4, offset = 0x4, fixed_abs, tag = 'smem constant byte address 0x4 - core index']
  #allocation1 [shape = 'u32[72,128]{1,0:T(1,128)}', space=vmem, size = 0x9000, scoped, tag = 'internal scratch']
  %s0 = inlined_call_operand.vmem [shape: f32[2,20,18,4], index: 0, kind: input, shape index: {}]
  %s1 = inlined_call_operand.vmem [shape: bf16[36,4], index: 1, kind: input, shape index: {}]
  %s2 = inlined_call_operand.vmem [shape: f32[1,4], index: 2, kind: input, shape index: {}]
  %s3 = inlined_call_operand.vmem [shape: bf16[36,4], index: 3, kind: input, shape index: {}]
  %s4 = inlined_call_operand.vmem [shape: f32[1,4], index: 4, kind: input, shape index: {}]
  %s5 = inlined_call_operand.vmem [shape: f32[2,256,4], index: 5, kind: output, shape index: {}]
  %s6 = sld [smem:[#allocation0]]
  $region53: #{tpu_custom_call.1} parent=0
    _
  %s8 = ssub.s32 1, %s6
  %s9 = scalar_select 0, %s8, %s6
  loop: start=0, step=1, limit=6
  $region2: #{tpu_custom_call.1} parent=0 // loop_pre_header
    _
  $region3: #{tpu_custom_call.1} parent=0 // loop_header
    %s11 = sphi 0, %s15
    %p12 = scmp.ge.s32.totalorder %s11, 6
    %s18 = sphi 0, %s30
    %s19 = sphi 0, %s26
    %s20 = sphi 0, %s18
    %s21 = sphi 0, %s19
    %s22 = sphi 0, %s20
    %s23 = sphi 0, %s21
    %s33 = sphi 0, %s35
    %s36 = sphi 0, %s33
    %s37 = sphi 0, %s36
    %s53 = sphi 0, %s37
    %s57 = sphi 0, %s57
    %s59 = sphi 0, %s57
    %s60 = sphi 0, %s59
    %s74 = sphi 0, %s60
    %s78 = sphi 0, %s78
    %s80 = sphi 0, %s78
    %s81 = sphi 0, %s80
    %s95 = sphi 0, %s81
    %s99 = sphi 0, %s99
    %s101 = sphi 0, %s99
    %s102 = sphi 0, %s101
    %s116 = sphi 0, %s102
    %s120 = sphi 0, %s120
    %s122 = sphi 0, %s120
    %s123 = sphi 0, %s122
    %s137 = sphi 0, %s123
    %s145 = sphi 0, %s147
    %s148 = sphi 0, %s145
    %s149 = sphi 0, %s148
    %s165 = sphi 0, %s149
  $region4: #{tpu_custom_call.1} parent=0 // loop_header_branch
    %14 = sbr.rel (%p12) target = $region8
  $region5: #{tpu_custom_call.1} parent=0 // loop_body
    %s16 = ssub.s32 %s11, 1
    %s17 = ssub.s32 %s11, 2
    %s24 = sadd.s32 1, %s19
    %p25 = scmp.ge.s32.totalorder %s24, 2
    %s26 = scalar_select %p25, 0, %s24
    %s27 = sadd.s32 1, %s18
    %s28 = scalar_select %p25, %s27, %s18
    %p29 = scmp.ge.s32.totalorder %s28, 2
    %s30 = scalar_select %p29, 0, %s28
    %s31 = ssub.s32 %s18, %s30
    %p32 = scmp.eq.s32.totalorder %s31, 0
    %s34 = sadd.s32 %s33, 1
    %s35 = scalar_select %p32, %s33, %s34
    %p38 = pneg %p32
    %p39 = scmp.eq.s32.totalorder %s11, 3
    %p40 = por %p38, %p39
    %p41 = scmp.ne.s32.totalorder %s33, %s36
    %p42 = scmp.eq.s32.totalorder %s11, 0
    %p43 = por %p41, %p42
    %p44 = scmp.ne.s32.totalorder %s33, %s36
    %p45 = scmp.eq.s32.totalorder %s16, 3
    %p46 = por %p44, %p45
    %p47 = scmp.ne.s32.totalorder %s36, %s37
    %p48 = scmp.eq.s32.totalorder %s16, 0
    %p49 = por %p47, %p48
    %p50 = scmp.ne.s32.totalorder %s36, %s37
    %p51 = scmp.eq.s32.totalorder %s17, 3
    %p52 = por %p50, %p51
    %p54 = scmp.ne.s32.totalorder %s37, %s53
    %p55 = scmp.eq.s32.totalorder %s17, 0
    %p56 = por %p54, %p55
    %s58 = sadd.s32 %s57, 1
    %p61 = scmp.eq.s32.totalorder %s11, 3
    %p62 = scmp.ne.s32.totalorder %s57, %s59
    %p63 = scmp.eq.s32.totalorder %s11, 0
    %p64 = por %p62, %p63
    %p65 = scmp.ne.s32.totalorder %s57, %s59
    %p66 = scmp.eq.s32.totalorder %s16, 3
    %p67 = por %p65, %p66
    %p68 = scmp.ne.s32.totalorder %s59, %s60
    %p69 = scmp.eq.s32.totalorder %s16, 0
    %p70 = por %p68, %p69
    %p71 = scmp.ne.s32.totalorder %s59, %s60
    %p72 = scmp.eq.s32.totalorder %s17, 3
    %p73 = por %p71, %p72
    %p75 = scmp.ne.s32.totalorder %s60, %s74
    %p76 = scmp.eq.s32.totalorder %s17, 0
    %p77 = por %p75, %p76
    %s79 = sadd.s32 %s78, 1
    %p82 = scmp.eq.s32.totalorder %s11, 3
    %p83 = scmp.ne.s32.totalorder %s78, %s80
    %p84 = scmp.eq.s32.totalorder %s11, 0
    %p85 = por %p83, %p84
    %p86 = scmp.ne.s32.totalorder %s78, %s80
    %p87 = scmp.eq.s32.totalorder %s16, 3
    %p88 = por %p86, %p87
    %p89 = scmp.ne.s32.totalorder %s80, %s81
    %p90 = scmp.eq.s32.totalorder %s16, 0
    %p91 = por %p89, %p90
    %p92 = scmp.ne.s32.totalorder %s80, %s81
    %p93 = scmp.eq.s32.totalorder %s17, 3
    %p94 = por %p92, %p93
    %p96 = scmp.ne.s32.totalorder %s81, %s95
    %p97 = scmp.eq.s32.totalorder %s17, 0
    %p98 = por %p96, %p97
    %s100 = sadd.s32 %s99, 1
    %p103 = scmp.eq.s32.totalorder %s11, 3
    %p104 = scmp.ne.s32.totalorder %s99, %s101
    %p105 = scmp.eq.s32.totalorder %s11, 0
    %p106 = por %p104, %p105
    %p107 = scmp.ne.s32.totalorder %s99, %s101
    %p108 = scmp.eq.s32.totalorder %s16, 3
    %p109 = por %p107, %p108
    %p110 = scmp.ne.s32.totalorder %s101, %s102
    %p111 = scmp.eq.s32.totalorder %s16, 0
    %p112 = por %p110, %p111
    %p113 = scmp.ne.s32.totalorder %s101, %s102
    %p114 = scmp.eq.s32.totalorder %s17, 3
    %p115 = por %p113, %p114
    %p117 = scmp.ne.s32.totalorder %s102, %s116
    %p118 = scmp.eq.s32.totalorder %s17, 0
    %p119 = por %p117, %p118
    %s121 = sadd.s32 %s120, 1
    %p124 = scmp.eq.s32.totalorder %s11, 3
    %p125 = scmp.ne.s32.totalorder %s120, %s122
    %p126 = scmp.eq.s32.totalorder %s11, 0
    %p127 = por %p125, %p126
    %p128 = scmp.ne.s32.totalorder %s120, %s122
    %p129 = scmp.eq.s32.totalorder %s16, 3
    %p130 = por %p128, %p129
    %p131 = scmp.ne.s32.totalorder %s122, %s123
    %p132 = scmp.eq.s32.totalorder %s16, 0
    %p133 = por %p131, %p132
    %p134 = scmp.ne.s32.totalorder %s122, %s123
    %p135 = scmp.eq.s32.totalorder %s17, 3
    %p136 = por %p134, %p135
    %p138 = scmp.ne.s32.totalorder %s123, %s137
    %p139 = scmp.eq.s32.totalorder %s17, 0
    %p140 = por %p138, %p139
    %s141 = ssub.s32 %s18, %s30
    %s142 = ssub.s32 %s19, %s26
    %s143 = sor.u32 %s141, %s142
    %p144 = scmp.eq.s32.totalorder %s143, 0
    %s146 = sadd.s32 %s145, 1
    %s147 = scalar_select %p144, %s145, %s146
    %p150 = pneg %p144
    %p151 = scmp.eq.s32.totalorder %s11, 3
    %p152 = por %p150, %p151
    %p153 = scmp.ne.s32.totalorder %s145, %s148
    %p154 = scmp.eq.s32.totalorder %s11, 0
    %p155 = por %p153, %p154
    %p156 = scmp.ne.s32.totalorder %s145, %s148
    %p157 = scmp.eq.s32.totalorder %s16, 3
    %p158 = por %p156, %p157
    %p159 = scmp.ne.s32.totalorder %s148, %s149
    %p160 = scmp.eq.s32.totalorder %s16, 0
    %p161 = por %p159, %p160
    %p162 = scmp.ne.s32.totalorder %s148, %s149
    %p163 = scmp.eq.s32.totalorder %s17, 3
    %p164 = por %p162, %p163
    %p166 = scmp.ne.s32.totalorder %s149, %s165
    %p167 = scmp.eq.s32.totalorder %s17, 0
    %p168 = por %p166, %p167
    %p169 = scmp.le.s32.totalorder 1, %s11
    %p170 = scmp.lt.s32.totalorder %s11, 5
    %p171 = pnand %p169, %p170
    %p172 = pneg %p171
    // Predicated region
    $region9: #{tpu_custom_call.1} parent=5 // pred_check
      _
    $region10: #{tpu_custom_call.1} parent=5 // pred_check_branch
      %174 = sbr.rel (%p171) target = $region12
    $region11: #{tpu_custom_call.1} parent=5 // pred_region
      %s175 = ssub.s32 %s11, 1
      // Predicated region
      $region13: #{tpu_custom_call.1} parent=11 // pred_check
        %p176 = pneg %p70
      $region14: #{tpu_custom_call.1} parent=11 // pred_check_branch
        %178 = sbr.rel (%p176) target = $region16
      $region15: #{tpu_custom_call.1} parent=11 // pred_region
        _
      $region16: #{tpu_custom_call.1} parent=11 // pred_fallthru
        _
      // Predicated region
      $region17: #{tpu_custom_call.1} parent=11 // pred_check
        %p179 = pneg %p91
      $region18: #{tpu_custom_call.1} parent=11 // pred_check_branch
        %181 = sbr.rel (%p179) target = $region20
      $region19: #{tpu_custom_call.1} parent=11 // pred_region
        _
      $region20: #{tpu_custom_call.1} parent=11 // pred_fallthru
        _
      // Predicated region
      $region21: #{tpu_custom_call.1} parent=11 // pred_check
        %p182 = pneg %p112
      $region22: #{tpu_custom_call.1} parent=11 // pred_check_branch
        %184 = sbr.rel (%p182) target = $region24
      $region23: #{tpu_custom_call.1} parent=11 // pred_region
        _
      $region24: #{tpu_custom_call.1} parent=11 // pred_fallthru
        _
      // Predicated region
      $region25: #{tpu_custom_call.1} parent=11 // pred_check
        %p185 = pneg %p133
      $region26: #{tpu_custom_call.1} parent=11 // pred_check_branch
        %187 = sbr.rel (%p185) target = $region28
      $region27: #{tpu_custom_call.1} parent=11 // pred_region
        _
      $region28: #{tpu_custom_call.1} parent=11 // pred_fallthru
        _
    $region12: #{tpu_custom_call.1} parent=5 // pred_fallthru
      _
    %p188 = scmp.lt.s32.totalorder %s11, 4
    // Predicated region
    $region29: #{tpu_custom_call.1} parent=5 // pred_check
      %p189 = pneg %p188
    $region30: #{tpu_custom_call.1} parent=5 // pred_check_branch
      %191 = sbr.rel (%p189) target = $region32
    $region31: #{tpu_custom_call.1} parent=5 // pred_region
      // Predicated region
      $region33: #{tpu_custom_call.1} parent=31 // pred_check
        %p192 = pneg %p43
      $region34: #{tpu_custom_call.1} parent=31 // pred_check_branch
        %194 = sbr.rel (%p192) target = $region36
      $region35: #{tpu_custom_call.1} parent=31 // pred_region
        %p195 = scmp.lt.s32.totalorder %s18, 1
        %s196 = scalar_select %p195, %s18, 1
        %s197 = smul.addr %s196, 60
        %s198 = smul.addr %s197, 8
        %s199 = scalar_lea.vmem %s0, %s198
      $region36: #{tpu_custom_call.1} parent=31 // pred_fallthru
        _
    $region32: #{tpu_custom_call.1} parent=5 // pred_fallthru
      _
    %p200 = scmp.le.s32.totalorder 1, %s11
    %p201 = scmp.lt.s32.totalorder %s11, 5
    %p202 = pnand %p200, %p201
    %p203 = pneg %p202
    // Predicated region
    $region37: #{tpu_custom_call.1} parent=5 // pred_check
      _
    $region38: #{tpu_custom_call.1} parent=5 // pred_check_branch
      %205 = sbr.rel (%p202) target = $region40
    $region39: #{tpu_custom_call.1} parent=5 // pred_region
      %s206 = ssub.s32 %s11, 1
      %p207 = scmp.lt.s32.totalorder %s20, 1
      %s208 = scalar_select %p207, %s20, 1
      %s209 = smul.addr %s208, 60
      %s210 = smul.addr %s209, 8
      %s211 = scalar_lea.vmem %s0, %s210
      %p212 = pneg %p49
      %p213 = pneg %p46
      %p214 = pneg %p70
      %p215 = pneg %p67
      %p216 = pneg %p91
      %p217 = pneg %p88
      %p218 = pneg %p112
      %p219 = pneg %p109
      %p220 = pneg %p133
      %p221 = pneg %p130
      %p222 = pneg %p161
      %p223 = pneg %p158
      %s224 = smul.u32 16, %s21
      %p225 = scmp.lt.s32.totalorder %s20, 1
      %s226 = scalar_select %p225, %s20, 1
      %p227 = scmp.lt.s32.totalorder %s224, 31
      %s228 = scalar_select %p227, %s224, 31
      %s229 = smul.addr %s226, 32
      %s230 = sadd.s32 %s228, %s229
      %s231 = smul.addr %s230, 8
      %s232 = scalar_lea.vmem %s5, %s231
      %p233 = scmp.lt.s32.totalorder %s20, 1
      %s234 = scalar_select %p233, %s20, 1
      %s235 = smul.addr %s234, 60
      %s236 = smul.addr %s235, 8
      %s237 = scalar_lea.vmem %s0, %s236
      %s238 = smul.u32 16, %s21
      %p239 = scmp.lt.s32.totalorder %s20, 1
      %s240 = scalar_select %p239, %s20, 1
      %p241 = scmp.lt.s32.totalorder %s238, 31
      %s242 = scalar_select %p241, %s238, 31
      %s243 = smul.addr %s240, 32
      %s244 = sadd.s32 %s242, %s243
      %s245 = smul.addr %s244, 8
      %s246 = scalar_lea.vmem %s5, %s245
      %s247 = smul.u32 16, %s21
      %s249 = smul.u32 %s21, 8
      %s250 = smul.u32 %s249, 24
      %s251 = scalar_lea.vmem %s237, %s250
      %v252 = vld [vmem:[%s251] sm:$0xff]
      %v253 = vld [vmem:[%s251 + $0x8] sm:$0xff]
      %v254 = vld [vmem:[%s251 + $0x18] sm:$0xff]
      %v255 = vld [vmem:[%s251 + $0x20] sm:$0xff]
      %v256 = vld [vmem:[%s251 + $0x30] sm:$0xff]
      %v257 = vld [vmem:[%s251 + $0x38] sm:$0xff]
      %v258 = vld [vmem:[%s251 + $0x48] sm:$0xff]
      %v259 = vld [vmem:[%s251 + $0x50] sm:$0xff]
      %v260 = vld [vmem:[%s251 + $0x60] sm:$0xff]
      %v261 = vld [vmem:[%s251 + $0x68] sm:$0xff]
      %v262 = vld [vmem:[%s251 + $0x78] sm:$0xff]
      %v263 = vld [vmem:[%s251 + $0x80] sm:$0xff]
      %v264 = vld [vmem:[%s251 + $0x90] sm:$0xff]
      %v265 = vld [vmem:[%s251 + $0x98] sm:$0xff]
      %v266 = vld [vmem:[%s251 + $0xa8] sm:$0xff]
      %v267 = vld [vmem:[%s251 + $0xb0] sm:$0xff]
      %v268 = vld [vmem:[%s251 + $0xc0] sm:$0xff]
      %v269 = vld [vmem:[%s251 + $0xc8] sm:$0xff]
      %v270 = vld [vmem:[%s251 + $0xd8] sm:$0xff]
      %v271 = vld [vmem:[%s251 + $0xe0] sm:$0xff]
      %v272 = vpack.c.bf16 %v252, %v252
      %v273 = vpack.c.bf16 %v253, %v253
      %v274 = vpack.c.bf16 %v254, %v254
      %v275 = vpack.c.bf16 %v255, %v255
      %v276 = vpack.c.bf16 %v256, %v256
      %v277 = vpack.c.bf16 %v257, %v257
      %v278 = vpack.c.bf16 %v258, %v258
      %v279 = vpack.c.bf16 %v259, %v259
      %v280 = vpack.c.bf16 %v260, %v260
      %v281 = vpack.c.bf16 %v261, %v261
      %v282 = vpack.c.bf16 %v262, %v262
      %v283 = vpack.c.bf16 %v263, %v263
      %v284 = vpack.c.bf16 %v264, %v264
      %v285 = vpack.c.bf16 %v265, %v265
      %v286 = vpack.c.bf16 %v266, %v266
      %v287 = vpack.c.bf16 %v267, %v267
      %v288 = vpack.c.bf16 %v268, %v268
      %v289 = vpack.c.bf16 %v269, %v269
      %v290 = vpack.c.bf16 %v270, %v270
      %v291 = vpack.c.bf16 %v271, %v271
      %v292 = vld [vmem:[%s251 + $0x1] sm:$0xff]
      %v293 = vld [vmem:[%s251 + $0x9] sm:$0xff]
      %v294 = vld [vmem:[%s251 + $0x19] sm:$0xff]
      %v295 = vld [vmem:[%s251 + $0x21] sm:$0xff]
      %v296 = vld [vmem:[%s251 + $0x31] sm:$0xff]
      %v297 = vld [vmem:[%s251 + $0x39] sm:$0xff]
      %v298 = vld [vmem:[%s251 + $0x49] sm:$0xff]
      %v299 = vld [vmem:[%s251 + $0x51] sm:$0xff]
      %v300 = vld [vmem:[%s251 + $0x61] sm:$0xff]
      %v301 = vld [vmem:[%s251 + $0x69] sm:$0xff]
      %v302 = vld [vmem:[%s251 + $0x79] sm:$0xff]
      %v303 = vld [vmem:[%s251 + $0x81] sm:$0xff]
      %v304 = vld [vmem:[%s251 + $0x91] sm:$0xff]
      %v305 = vld [vmem:[%s251 + $0x99] sm:$0xff]
      %v306 = vld [vmem:[%s251 + $0xa9] sm:$0xff]
      %v307 = vld [vmem:[%s251 + $0xb1] sm:$0xff]
      %v308 = vld [vmem:[%s251 + $0xc1] sm:$0xff]
      %v309 = vld [vmem:[%s251 + $0xc9] sm:$0xff]
      %v310 = vld [vmem:[%s251 + $0xd9] sm:$0xff]
      %v311 = vld [vmem:[%s251 + $0xe1] sm:$0xff]
      %v312 = vpack.c.bf16 %v292, %v292
      %v313 = vpack.c.bf16 %v293, %v293
      %v314 = vpack.c.bf16 %v294, %v294
      %v315 = vpack.c.bf16 %v295, %v295
      %v316 = vpack.c.bf16 %v296, %v296
      %v317 = vpack.c.bf16 %v297, %v297
      %v318 = vpack.c.bf16 %v298, %v298
      %v319 = vpack.c.bf16 %v299, %v299
      %v320 = vpack.c.bf16 %v300, %v300
      %v321 = vpack.c.bf16 %v301, %v301
      %v322 = vpack.c.bf16 %v302, %v302
      %v323 = vpack.c.bf16 %v303, %v303
      %v324 = vpack.c.bf16 %v304, %v304
      %v325 = vpack.c.bf16 %v305, %v305
      %v326 = vpack.c.bf16 %v306, %v306
      %v327 = vpack.c.bf16 %v307, %v307
      %v328 = vpack.c.bf16 %v308, %v308
      %v329 = vpack.c.bf16 %v309, %v309
      %v330 = vpack.c.bf16 %v310, %v310
      %v331 = vpack.c.bf16 %v311, %v311
      %v332 = vld [vmem:[%s251 + $0x2] sm:$0xff]
      %v333 = vld [vmem:[%s251 + $0xa] sm:$0xff]
      %v334 = vld [vmem:[%s251 + $0x1a] sm:$0xff]
      %v335 = vld [vmem:[%s251 + $0x22] sm:$0xff]
      %v336 = vld [vmem:[%s251 + $0x32] sm:$0xff]
      %v337 = vld [vmem:[%s251 + $0x3a] sm:$0xff]
      %v338 = vld [vmem:[%s251 + $0x4a] sm:$0xff]
      %v339 = vld [vmem:[%s251 + $0x52] sm:$0xff]
      %v340 = vld [vmem:[%s251 + $0x62] sm:$0xff]
      %v341 = vld [vmem:[%s251 + $0x6a] sm:$0xff]
      %v342 = vld [vmem:[%s251 + $0x7a] sm:$0xff]
      %v343 = vld [vmem:[%s251 + $0x82] sm:$0xff]
      %v344 = vld [vmem:[%s251 + $0x92] sm:$0xff]
      %v345 = vld [vmem:[%s251 + $0x9a] sm:$0xff]
      %v346 = vld [vmem:[%s251 + $0xaa] sm:$0xff]
      %v347 = vld [vmem:[%s251 + $0xb2] sm:$0xff]
      %v348 = vld [vmem:[%s251 + $0xc2] sm:$0xff]
      %v349 = vld [vmem:[%s251 + $0xca] sm:$0xff]
      %v350 = vld [vmem:[%s251 + $0xda] sm:$0xff]
      %v351 = vld [vmem:[%s251 + $0xe2] sm:$0xff]
      %v352 = vpack.c.bf16 %v332, %v332
      %v353 = vpack.c.bf16 %v333, %v333
      %v354 = vpack.c.bf16 %v334, %v334
      %v355 = vpack.c.bf16 %v335, %v335
      %v356 = vpack.c.bf16 %v336, %v336
      %v357 = vpack.c.bf16 %v337, %v337
      %v358 = vpack.c.bf16 %v338, %v338
      %v359 = vpack.c.bf16 %v339, %v339
      %v360 = vpack.c.bf16 %v340, %v340
      %v361 = vpack.c.bf16 %v341, %v341
      %v362 = vpack.c.bf16 %v342, %v342
      %v363 = vpack.c.bf16 %v343, %v343
      %v364 = vpack.c.bf16 %v344, %v344
      %v365 = vpack.c.bf16 %v345, %v345
      %v366 = vpack.c.bf16 %v346, %v346
      %v367 = vpack.c.bf16 %v347, %v347
      %v368 = vpack.c.bf16 %v348, %v348
      %v369 = vpack.c.bf16 %v349, %v349
      %v370 = vpack.c.bf16 %v350, %v350
      %v371 = vpack.c.bf16 %v351, %v351
      %s372 = sadd.s32 %s249, 1
      %s373 = smul.u32 %s372, 24
      %s374 = scalar_lea.vmem %s237, %s373
      %v375 = vld [vmem:[%s374] sm:$0xff]
      %v376 = vld [vmem:[%s374 + $0x8] sm:$0xff]
      %v377 = vld [vmem:[%s374 + $0x18] sm:$0xff]
      %v378 = vld [vmem:[%s374 + $0x20] sm:$0xff]
      %v379 = vld [vmem:[%s374 + $0x30] sm:$0xff]
      %v380 = vld [vmem:[%s374 + $0x38] sm:$0xff]
      %v381 = vld [vmem:[%s374 + $0x48] sm:$0xff]
      %v382 = vld [vmem:[%s374 + $0x50] sm:$0xff]
      %v383 = vld [vmem:[%s374 + $0x60] sm:$0xff]
      %v384 = vld [vmem:[%s374 + $0x68] sm:$0xff]
      %v385 = vld [vmem:[%s374 + $0x78] sm:$0xff]
      %v386 = vld [vmem:[%s374 + $0x80] sm:$0xff]
      %v387 = vld [vmem:[%s374 + $0x90] sm:$0xff]
      %v388 = vld [vmem:[%s374 + $0x98] sm:$0xff]
      %v389 = vld [vmem:[%s374 + $0xa8] sm:$0xff]
      %v390 = vld [vmem:[%s374 + $0xb0] sm:$0xff]
      %v391 = vld [vmem:[%s374 + $0xc0] sm:$0xff]
      %v392 = vld [vmem:[%s374 + $0xc8] sm:$0xff]
      %v393 = vld [vmem:[%s374 + $0xd8] sm:$0xff]
      %v394 = vld [vmem:[%s374 + $0xe0] sm:$0xff]
      %v395 = vpack.c.bf16 %v375, %v375
      %v396 = vpack.c.bf16 %v376, %v376
      %v397 = vpack.c.bf16 %v377, %v377
      %v398 = vpack.c.bf16 %v378, %v378
      %v399 = vpack.c.bf16 %v379, %v379
      %v400 = vpack.c.bf16 %v380, %v380
      %v401 = vpack.c.bf16 %v381, %v381
      %v402 = vpack.c.bf16 %v382, %v382
      %v403 = vpack.c.bf16 %v383, %v383
      %v404 = vpack.c.bf16 %v384, %v384
      %v405 = vpack.c.bf16 %v385, %v385
      %v406 = vpack.c.bf16 %v386, %v386
      %v407 = vpack.c.bf16 %v387, %v387
      %v408 = vpack.c.bf16 %v388, %v388
      %v409 = vpack.c.bf16 %v389, %v389
      %v410 = vpack.c.bf16 %v390, %v390
      %v411 = vpack.c.bf16 %v391, %v391
      %v412 = vpack.c.bf16 %v392, %v392
      %v413 = vpack.c.bf16 %v393, %v393
      %v414 = vpack.c.bf16 %v394, %v394
      %v415 = vld [vmem:[%s374 + $0x1] sm:$0xff]
      %v416 = vld [vmem:[%s374 + $0x9] sm:$0xff]
      %v417 = vld [vmem:[%s374 + $0x19] sm:$0xff]
      %v418 = vld [vmem:[%s374 + $0x21] sm:$0xff]
      %v419 = vld [vmem:[%s374 + $0x31] sm:$0xff]
      %v420 = vld [vmem:[%s374 + $0x39] sm:$0xff]
      %v421 = vld [vmem:[%s374 + $0x49] sm:$0xff]
      %v422 = vld [vmem:[%s374 + $0x51] sm:$0xff]
      %v423 = vld [vmem:[%s374 + $0x61] sm:$0xff]
      %v424 = vld [vmem:[%s374 + $0x69] sm:$0xff]
      %v425 = vld [vmem:[%s374 + $0x79] sm:$0xff]
      %v426 = vld [vmem:[%s374 + $0x81] sm:$0xff]
      %v427 = vld [vmem:[%s374 + $0x91] sm:$0xff]
      %v428 = vld [vmem:[%s374 + $0x99] sm:$0xff]
      %v429 = vld [vmem:[%s374 + $0xa9] sm:$0xff]
      %v430 = vld [vmem:[%s374 + $0xb1] sm:$0xff]
      %v431 = vld [vmem:[%s374 + $0xc1] sm:$0xff]
      %v432 = vld [vmem:[%s374 + $0xc9] sm:$0xff]
      %v433 = vld [vmem:[%s374 + $0xd9] sm:$0xff]
      %v434 = vld [vmem:[%s374 + $0xe1] sm:$0xff]
      %v435 = vpack.c.bf16 %v415, %v415
      %v436 = vpack.c.bf16 %v416, %v416
      %v437 = vpack.c.bf16 %v417, %v417
      %v438 = vpack.c.bf16 %v418, %v418
      %v439 = vpack.c.bf16 %v419, %v419
      %v440 = vpack.c.bf16 %v420, %v420
      %v441 = vpack.c.bf16 %v421, %v421
      %v442 = vpack.c.bf16 %v422, %v422
      %v443 = vpack.c.bf16 %v423, %v423
      %v444 = vpack.c.bf16 %v424, %v424
      %v445 = vpack.c.bf16 %v425, %v425
      %v446 = vpack.c.bf16 %v426, %v426
      %v447 = vpack.c.bf16 %v427, %v427
      %v448 = vpack.c.bf16 %v428, %v428
      %v449 = vpack.c.bf16 %v429, %v429
      %v450 = vpack.c.bf16 %v430, %v430
      %v451 = vpack.c.bf16 %v431, %v431
      %v452 = vpack.c.bf16 %v432, %v432
      %v453 = vpack.c.bf16 %v433, %v433
      %v454 = vpack.c.bf16 %v434, %v434
      %v455 = vld [vmem:[%s374 + $0x2] sm:$0xff]
      %v456 = vld [vmem:[%s374 + $0xa] sm:$0xff]
      %v457 = vld [vmem:[%s374 + $0x1a] sm:$0xff]
      %v458 = vld [vmem:[%s374 + $0x22] sm:$0xff]
      %v459 = vld [vmem:[%s374 + $0x32] sm:$0xff]
      %v460 = vld [vmem:[%s374 + $0x3a] sm:$0xff]
      %v461 = vld [vmem:[%s374 + $0x4a] sm:$0xff]
      %v462 = vld [vmem:[%s374 + $0x52] sm:$0xff]
      %v463 = vld [vmem:[%s374 + $0x62] sm:$0xff]
      %v464 = vld [vmem:[%s374 + $0x6a] sm:$0xff]
      %v465 = vld [vmem:[%s374 + $0x7a] sm:$0xff]
      %v466 = vld [vmem:[%s374 + $0x82] sm:$0xff]
      %v467 = vld [vmem:[%s374 + $0x92] sm:$0xff]
      %v468 = vld [vmem:[%s374 + $0x9a] sm:$0xff]
      %v469 = vld [vmem:[%s374 + $0xaa] sm:$0xff]
      %v470 = vld [vmem:[%s374 + $0xb2] sm:$0xff]
      %v471 = vld [vmem:[%s374 + $0xc2] sm:$0xff]
      %v472 = vld [vmem:[%s374 + $0xca] sm:$0xff]
      %v473 = vld [vmem:[%s374 + $0xda] sm:$0xff]
      %v474 = vld [vmem:[%s374 + $0xe2] sm:$0xff]
      %v475 = vpack.c.bf16 %v455, %v455
      %v476 = vpack.c.bf16 %v456, %v456
      %v477 = vpack.c.bf16 %v457, %v457
      %v478 = vpack.c.bf16 %v458, %v458
      %v479 = vpack.c.bf16 %v459, %v459
      %v480 = vpack.c.bf16 %v460, %v460
      %v481 = vpack.c.bf16 %v461, %v461
      %v482 = vpack.c.bf16 %v462, %v462
      %v483 = vpack.c.bf16 %v463, %v463
      %v484 = vpack.c.bf16 %v464, %v464
      %v485 = vpack.c.bf16 %v465, %v465
      %v486 = vpack.c.bf16 %v466, %v466
      %v487 = vpack.c.bf16 %v467, %v467
      %v488 = vpack.c.bf16 %v468, %v468
      %v489 = vpack.c.bf16 %v469, %v469
      %v490 = vpack.c.bf16 %v470, %v470
      %v491 = vpack.c.bf16 %v471, %v471
      %v492 = vpack.c.bf16 %v472, %v472
      %v493 = vpack.c.bf16 %v473, %v473
      %v494 = vpack.c.bf16 %v474, %v474
      %s495 = sadd.s32 %s249, 2
      %s496 = smul.u32 %s495, 24
      %s497 = scalar_lea.vmem %s237, %s496
      %v498 = vld [vmem:[%s497] sm:$0xff]
      %v499 = vld [vmem:[%s497 + $0x8] sm:$0xff]
      %v500 = vld [vmem:[%s497 + $0x18] sm:$0xff]
      %v501 = vld [vmem:[%s497 + $0x20] sm:$0xff]
      %v502 = vld [vmem:[%s497 + $0x30] sm:$0xff]
      %v503 = vld [vmem:[%s497 + $0x38] sm:$0xff]
      %v504 = vld [vmem:[%s497 + $0x48] sm:$0xff]
      %v505 = vld [vmem:[%s497 + $0x50] sm:$0xff]
      %v506 = vld [vmem:[%s497 + $0x60] sm:$0xff]
      %v507 = vld [vmem:[%s497 + $0x68] sm:$0xff]
      %v508 = vld [vmem:[%s497 + $0x78] sm:$0xff]
      %v509 = vld [vmem:[%s497 + $0x80] sm:$0xff]
      %v510 = vld [vmem:[%s497 + $0x90] sm:$0xff]
      %v511 = vld [vmem:[%s497 + $0x98] sm:$0xff]
      %v512 = vld [vmem:[%s497 + $0xa8] sm:$0xff]
      %v513 = vld [vmem:[%s497 + $0xb0] sm:$0xff]
      %v514 = vld [vmem:[%s497 + $0xc0] sm:$0xff]
      %v515 = vld [vmem:[%s497 + $0xc8] sm:$0xff]
      %v516 = vld [vmem:[%s497 + $0xd8] sm:$0xff]
      %v517 = vld [vmem:[%s497 + $0xe0] sm:$0xff]
      %v518 = vpack.c.bf16 %v498, %v498
      %v519 = vpack.c.bf16 %v499, %v499
      %v520 = vpack.c.bf16 %v500, %v500
      %v521 = vpack.c.bf16 %v501, %v501
      %v522 = vpack.c.bf16 %v502, %v502
      %v523 = vpack.c.bf16 %v503, %v503
      %v524 = vpack.c.bf16 %v504, %v504
      %v525 = vpack.c.bf16 %v505, %v505
      %v526 = vpack.c.bf16 %v506, %v506
      %v527 = vpack.c.bf16 %v507, %v507
      %v528 = vpack.c.bf16 %v508, %v508
      %v529 = vpack.c.bf16 %v509, %v509
      %v530 = vpack.c.bf16 %v510, %v510
      %v531 = vpack.c.bf16 %v511, %v511
      %v532 = vpack.c.bf16 %v512, %v512
      %v533 = vpack.c.bf16 %v513, %v513
      %v534 = vpack.c.bf16 %v514, %v514
      %v535 = vpack.c.bf16 %v515, %v515
      %v536 = vpack.c.bf16 %v516, %v516
      %v537 = vpack.c.bf16 %v517, %v517
      %v538 = vld [vmem:[%s497 + $0x1] sm:$0xff]
      %v539 = vld [vmem:[%s497 + $0x9] sm:$0xff]
      %v540 = vld [vmem:[%s497 + $0x19] sm:$0xff]
      %v541 = vld [vmem:[%s497 + $0x21] sm:$0xff]
      %v542 = vld [vmem:[%s497 + $0x31] sm:$0xff]
      %v543 = vld [vmem:[%s497 + $0x39] sm:$0xff]
      %v544 = vld [vmem:[%s497 + $0x49] sm:$0xff]
      %v545 = vld [vmem:[%s497 + $0x51] sm:$0xff]
      %v546 = vld [vmem:[%s497 + $0x61] sm:$0xff]
      %v547 = vld [vmem:[%s497 + $0x69] sm:$0xff]
      %v548 = vld [vmem:[%s497 + $0x79] sm:$0xff]
      %v549 = vld [vmem:[%s497 + $0x81] sm:$0xff]
      %v550 = vld [vmem:[%s497 + $0x91] sm:$0xff]
      %v551 = vld [vmem:[%s497 + $0x99] sm:$0xff]
      %v552 = vld [vmem:[%s497 + $0xa9] sm:$0xff]
      %v553 = vld [vmem:[%s497 + $0xb1] sm:$0xff]
      %v554 = vld [vmem:[%s497 + $0xc1] sm:$0xff]
      %v555 = vld [vmem:[%s497 + $0xc9] sm:$0xff]
      %v556 = vld [vmem:[%s497 + $0xd9] sm:$0xff]
      %v557 = vld [vmem:[%s497 + $0xe1] sm:$0xff]
      %v558 = vpack.c.bf16 %v538, %v538
      %v559 = vpack.c.bf16 %v539, %v539
      %v560 = vpack.c.bf16 %v540, %v540
      %v561 = vpack.c.bf16 %v541, %v541
      %v562 = vpack.c.bf16 %v542, %v542
      %v563 = vpack.c.bf16 %v543, %v543
      %v564 = vpack.c.bf16 %v544, %v544
      %v565 = vpack.c.bf16 %v545, %v545
      %v566 = vpack.c.bf16 %v546, %v546
      %v567 = vpack.c.bf16 %v547, %v547
      %v568 = vpack.c.bf16 %v548, %v548
      %v569 = vpack.c.bf16 %v549, %v549
      %v570 = vpack.c.bf16 %v550, %v550
      %v571 = vpack.c.bf16 %v551, %v551
      %v572 = vpack.c.bf16 %v552, %v552
      %v573 = vpack.c.bf16 %v553, %v553
      %v574 = vpack.c.bf16 %v554, %v554
      %v575 = vpack.c.bf16 %v555, %v555
      %v576 = vpack.c.bf16 %v556, %v556
      %v577 = vpack.c.bf16 %v557, %v557
      %v578 = vld [vmem:[%s497 + $0x2] sm:$0xff]
      %v579 = vld [vmem:[%s497 + $0xa] sm:$0xff]
      %v580 = vld [vmem:[%s497 + $0x1a] sm:$0xff]
      %v581 = vld [vmem:[%s497 + $0x22] sm:$0xff]
      %v582 = vld [vmem:[%s497 + $0x32] sm:$0xff]
      %v583 = vld [vmem:[%s497 + $0x3a] sm:$0xff]
      %v584 = vld [vmem:[%s497 + $0x4a] sm:$0xff]
      %v585 = vld [vmem:[%s497 + $0x52] sm:$0xff]
      %v586 = vld [vmem:[%s497 + $0x62] sm:$0xff]
      %v587 = vld [vmem:[%s497 + $0x6a] sm:$0xff]
      %v588 = vld [vmem:[%s497 + $0x7a] sm:$0xff]
      %v589 = vld [vmem:[%s497 + $0x82] sm:$0xff]
      %v590 = vld [vmem:[%s497 + $0x92] sm:$0xff]
      %v591 = vld [vmem:[%s497 + $0x9a] sm:$0xff]
      %v592 = vld [vmem:[%s497 + $0xaa] sm:$0xff]
      %v593 = vld [vmem:[%s497 + $0xb2] sm:$0xff]
      %v594 = vld [vmem:[%s497 + $0xc2] sm:$0xff]
      %v595 = vld [vmem:[%s497 + $0xca] sm:$0xff]
      %v596 = vld [vmem:[%s497 + $0xda] sm:$0xff]
      %v597 = vld [vmem:[%s497 + $0xe2] sm:$0xff]
      %v598 = vpack.c.bf16 %v578, %v578
      %v599 = vpack.c.bf16 %v579, %v579
      %v600 = vpack.c.bf16 %v580, %v580
      %v601 = vpack.c.bf16 %v581, %v581
      %v602 = vpack.c.bf16 %v582, %v582
      %v603 = vpack.c.bf16 %v583, %v583
      %v604 = vpack.c.bf16 %v584, %v584
      %v605 = vpack.c.bf16 %v585, %v585
      %v606 = vpack.c.bf16 %v586, %v586
      %v607 = vpack.c.bf16 %v587, %v587
      %v608 = vpack.c.bf16 %v588, %v588
      %v609 = vpack.c.bf16 %v589, %v589
      %v610 = vpack.c.bf16 %v590, %v590
      %v611 = vpack.c.bf16 %v591, %v591
      %v612 = vpack.c.bf16 %v592, %v592
      %v613 = vpack.c.bf16 %v593, %v593
      %v614 = vpack.c.bf16 %v594, %v594
      %v615 = vpack.c.bf16 %v595, %v595
      %v616 = vpack.c.bf16 %v596, %v596
      %v617 = vpack.c.bf16 %v597, %v597
      %v638 = vunpack.c.l.b16 %v272
      %v639 = vunpack.c.l.b16 %v273
      %v640 = vunpack.c.l.b16 %v274
      %v641 = vunpack.c.l.b16 %v275
      %v642 = vunpack.c.l.b16 %v276
      %v643 = vunpack.c.l.b16 %v277
      %v644 = vunpack.c.l.b16 %v278
      %v645 = vunpack.c.l.b16 %v279
      %v646 = vunpack.c.l.b16 %v280
      %v647 = vunpack.c.l.b16 %v281
      %v648 = vunpack.c.l.b16 %v282
      %v649 = vunpack.c.l.b16 %v283
      %v650 = vunpack.c.l.b16 %v284
      %v651 = vunpack.c.l.b16 %v285
      %v652 = vunpack.c.l.b16 %v286
      %v653 = vunpack.c.l.b16 %v287
      %v654 = vunpack.c.l.b16 %v288
      %v655 = vunpack.c.l.b16 %v289
      %v656 = vunpack.c.l.b16 %v290
      %v657 = vunpack.c.l.b16 %v291
      %v658 = vpack.c.b16 %v639, %v638
      %v659 = vpack.c.b16 %v641, %v640
      %v660 = vpack.c.b16 %v643, %v642
      %v661 = vpack.c.b16 %v645, %v644
      %v662 = vpack.c.b16 %v647, %v646
      %v663 = vpack.c.b16 %v649, %v648
      %v664 = vpack.c.b16 %v651, %v650
      %v665 = vpack.c.b16 %v653, %v652
      %v666 = vpack.c.b16 %v655, %v654
      %v667 = vpack.c.b16 %v657, %v656
      %v688 = vunpack.c.l.b16 %v312
      %v689 = vunpack.c.l.b16 %v313
      %v690 = vunpack.c.l.b16 %v314
      %v691 = vunpack.c.l.b16 %v315
      %v692 = vunpack.c.l.b16 %v316
      %v693 = vunpack.c.l.b16 %v317
      %v694 = vunpack.c.l.b16 %v318
      %v695 = vunpack.c.l.b16 %v319
      %v696 = vunpack.c.l.b16 %v320
      %v697 = vunpack.c.l.b16 %v321
      %v698 = vunpack.c.l.b16 %v322
      %v699 = vunpack.c.l.b16 %v323
      %v700 = vunpack.c.l.b16 %v324
      %v701 = vunpack.c.l.b16 %v325
      %v702 = vunpack.c.l.b16 %v326
      %v703 = vunpack.c.l.b16 %v327
      %v704 = vunpack.c.l.b16 %v328
      %v705 = vunpack.c.l.b16 %v329
      %v706 = vunpack.c.l.b16 %v330
      %v707 = vunpack.c.l.b16 %v331
      %v708 = vpack.c.b16 %v689, %v688
      %v709 = vpack.c.b16 %v691, %v690
      %v710 = vpack.c.b16 %v693, %v692
      %v711 = vpack.c.b16 %v695, %v694
      %v712 = vpack.c.b16 %v697, %v696
      %v713 = vpack.c.b16 %v699, %v698
      %v714 = vpack.c.b16 %v701, %v700
      %v715 = vpack.c.b16 %v703, %v702
      %v716 = vpack.c.b16 %v705, %v704
      %v717 = vpack.c.b16 %v707, %v706
      %718 = vrot.lane.b32.xlu0 %v708, 4
      %v719 = vpop.permute.xlu0 %718
      %720 = vrot.lane.b32.xlu0 %v709, 4
      %v721 = vpop.permute.xlu0 %720
      %722 = vrot.lane.b32.xlu0 %v710, 4
      %v723 = vpop.permute.xlu0 %722
      %724 = vrot.lane.b32.xlu0 %v711, 4
      %v725 = vpop.permute.xlu0 %724
      %726 = vrot.lane.b32.xlu0 %v712, 4
      %v727 = vpop.permute.xlu0 %726
      %728 = vrot.lane.b32.xlu0 %v713, 4
      %v729 = vpop.permute.xlu0 %728
      %730 = vrot.lane.b32.xlu0 %v714, 4
      %v731 = vpop.permute.xlu0 %730
      %732 = vrot.lane.b32.xlu0 %v715, 4
      %v733 = vpop.permute.xlu0 %732
      %734 = vrot.lane.b32.xlu0 %v716, 4
      %v735 = vpop.permute.xlu0 %734
      %736 = vrot.lane.b32.xlu0 %v717, 4
      %v737 = vpop.permute.xlu0 %736
      %v758 = vunpack.c.l.b16 %v352
      %v759 = vunpack.c.l.b16 %v353
      %v760 = vunpack.c.l.b16 %v354
      %v761 = vunpack.c.l.b16 %v355
      %v762 = vunpack.c.l.b16 %v356
      %v763 = vunpack.c.l.b16 %v357
      %v764 = vunpack.c.l.b16 %v358
      %v765 = vunpack.c.l.b16 %v359
      %v766 = vunpack.c.l.b16 %v360
      %v767 = vunpack.c.l.b16 %v361
      %v768 = vunpack.c.l.b16 %v362
      %v769 = vunpack.c.l.b16 %v363
      %v770 = vunpack.c.l.b16 %v364
      %v771 = vunpack.c.l.b16 %v365
      %v772 = vunpack.c.l.b16 %v366
      %v773 = vunpack.c.l.b16 %v367
      %v774 = vunpack.c.l.b16 %v368
      %v775 = vunpack.c.l.b16 %v369
      %v776 = vunpack.c.l.b16 %v370
      %v777 = vunpack.c.l.b16 %v371
      %v778 = vpack.c.b16 %v759, %v758
      %v779 = vpack.c.b16 %v761, %v760
      %v780 = vpack.c.b16 %v763, %v762
      %v781 = vpack.c.b16 %v765, %v764
      %v782 = vpack.c.b16 %v767, %v766
      %v783 = vpack.c.b16 %v769, %v768
      %v784 = vpack.c.b16 %v771, %v770
      %v785 = vpack.c.b16 %v773, %v772
      %v786 = vpack.c.b16 %v775, %v774
      %v787 = vpack.c.b16 %v777, %v776
      %788 = vrot.lane.b32.xlu0 %v778, 8
      %v789 = vpop.permute.xlu0 %788
      %790 = vrot.lane.b32.xlu0 %v779, 8
      %v791 = vpop.permute.xlu0 %790
      %792 = vrot.lane.b32.xlu0 %v780, 8
      %v793 = vpop.permute.xlu0 %792
      %794 = vrot.lane.b32.xlu0 %v781, 8
      %v795 = vpop.permute.xlu0 %794
      %796 = vrot.lane.b32.xlu0 %v782, 8
      %v797 = vpop.permute.xlu0 %796
      %798 = vrot.lane.b32.xlu0 %v783, 8
      %v799 = vpop.permute.xlu0 %798
      %800 = vrot.lane.b32.xlu0 %v784, 8
      %v801 = vpop.permute.xlu0 %800
      %802 = vrot.lane.b32.xlu0 %v785, 8
      %v803 = vpop.permute.xlu0 %802
      %804 = vrot.lane.b32.xlu0 %v786, 8
      %v805 = vpop.permute.xlu0 %804
      %806 = vrot.lane.b32.xlu0 %v787, 8
      %v807 = vpop.permute.xlu0 %806
      %v828 = vunpack.c.l.b16 %v395
      %v829 = vunpack.c.l.b16 %v396
      %v830 = vunpack.c.l.b16 %v397
      %v831 = vunpack.c.l.b16 %v398
      %v832 = vunpack.c.l.b16 %v399
      %v833 = vunpack.c.l.b16 %v400
      %v834 = vunpack.c.l.b16 %v401
      %v835 = vunpack.c.l.b16 %v402
      %v836 = vunpack.c.l.b16 %v403
      %v837 = vunpack.c.l.b16 %v404
      %v838 = vunpack.c.l.b16 %v405
      %v839 = vunpack.c.l.b16 %v406
      %v840 = vunpack.c.l.b16 %v407
      %v841 = vunpack.c.l.b16 %v408
      %v842 = vunpack.c.l.b16 %v409
      %v843 = vunpack.c.l.b16 %v410
      %v844 = vunpack.c.l.b16 %v411
      %v845 = vunpack.c.l.b16 %v412
      %v846 = vunpack.c.l.b16 %v413
      %v847 = vunpack.c.l.b16 %v414
      %v848 = vpack.c.b16 %v829, %v828
      %v849 = vpack.c.b16 %v831, %v830
      %v850 = vpack.c.b16 %v833, %v832
      %v851 = vpack.c.b16 %v835, %v834
      %v852 = vpack.c.b16 %v837, %v836
      %v853 = vpack.c.b16 %v839, %v838
      %v854 = vpack.c.b16 %v841, %v840
      %v855 = vpack.c.b16 %v843, %v842
      %v856 = vpack.c.b16 %v845, %v844
      %v857 = vpack.c.b16 %v847, %v846
      %858 = vrot.lane.b32.xlu0 %v848, 12
      %v859 = vpop.permute.xlu0 %858
      %860 = vrot.lane.b32.xlu0 %v849, 12
      %v861 = vpop.permute.xlu0 %860
      %862 = vrot.lane.b32.xlu0 %v850, 12
      %v863 = vpop.permute.xlu0 %862
      %864 = vrot.lane.b32.xlu0 %v851, 12
      %v865 = vpop.permute.xlu0 %864
      %866 = vrot.lane.b32.xlu0 %v852, 12
      %v867 = vpop.permute.xlu0 %866
      %868 = vrot.lane.b32.xlu0 %v853, 12
      %v869 = vpop.permute.xlu0 %868
      %870 = vrot.lane.b32.xlu0 %v854, 12
      %v871 = vpop.permute.xlu0 %870
      %872 = vrot.lane.b32.xlu0 %v855, 12
      %v873 = vpop.permute.xlu0 %872
      %874 = vrot.lane.b32.xlu0 %v856, 12
      %v875 = vpop.permute.xlu0 %874
      %876 = vrot.lane.b32.xlu0 %v857, 12
      %v877 = vpop.permute.xlu0 %876
      %v898 = vunpack.c.l.b16 %v435
      %v899 = vunpack.c.l.b16 %v436
      %v900 = vunpack.c.l.b16 %v437
      %v901 = vunpack.c.l.b16 %v438
      %v902 = vunpack.c.l.b16 %v439
      %v903 = vunpack.c.l.b16 %v440
      %v904 = vunpack.c.l.b16 %v441
      %v905 = vunpack.c.l.b16 %v442
      %v906 = vunpack.c.l.b16 %v443
      %v907 = vunpack.c.l.b16 %v444
      %v908 = vunpack.c.l.b16 %v445
      %v909 = vunpack.c.l.b16 %v446
      %v910 = vunpack.c.l.b16 %v447
      %v911 = vunpack.c.l.b16 %v448
      %v912 = vunpack.c.l.b16 %v449
      %v913 = vunpack.c.l.b16 %v450
      %v914 = vunpack.c.l.b16 %v451
      %v915 = vunpack.c.l.b16 %v452
      %v916 = vunpack.c.l.b16 %v453
      %v917 = vunpack.c.l.b16 %v454
      %v918 = vpack.c.b16 %v899, %v898
      %v919 = vpack.c.b16 %v901, %v900
      %v920 = vpack.c.b16 %v903, %v902
      %v921 = vpack.c.b16 %v905, %v904
      %v922 = vpack.c.b16 %v907, %v906
      %v923 = vpack.c.b16 %v909, %v908
      %v924 = vpack.c.b16 %v911, %v910
      %v925 = vpack.c.b16 %v913, %v912
      %v926 = vpack.c.b16 %v915, %v914
      %v927 = vpack.c.b16 %v917, %v916
      %928 = vrot.lane.b32.xlu0 %v918, 16
      %v929 = vpop.permute.xlu0 %928
      %930 = vrot.lane.b32.xlu0 %v919, 16
      %v931 = vpop.permute.xlu0 %930
      %932 = vrot.lane.b32.xlu0 %v920, 16
      %v933 = vpop.permute.xlu0 %932
      %934 = vrot.lane.b32.xlu0 %v921, 16
      %v935 = vpop.permute.xlu0 %934
      %936 = vrot.lane.b32.xlu0 %v922, 16
      %v937 = vpop.permute.xlu0 %936
      %938 = vrot.lane.b32.xlu0 %v923, 16
      %v939 = vpop.permute.xlu0 %938
      %940 = vrot.lane.b32.xlu0 %v924, 16
      %v941 = vpop.permute.xlu0 %940
      %942 = vrot.lane.b32.xlu0 %v925, 16
      %v943 = vpop.permute.xlu0 %942
      %944 = vrot.lane.b32.xlu0 %v926, 16
      %v945 = vpop.permute.xlu0 %944
      %946 = vrot.lane.b32.xlu0 %v927, 16
      %v947 = vpop.permute.xlu0 %946
      %v968 = vunpack.c.l.b16 %v475
      %v969 = vunpack.c.l.b16 %v476
      %v970 = vunpack.c.l.b16 %v477
      %v971 = vunpack.c.l.b16 %v478
      %v972 = vunpack.c.l.b16 %v479
      %v973 = vunpack.c.l.b16 %v480
      %v974 = vunpack.c.l.b16 %v481
      %v975 = vunpack.c.l.b16 %v482
      %v976 = vunpack.c.l.b16 %v483
      %v977 = vunpack.c.l.b16 %v484
      %v978 = vunpack.c.l.b16 %v485
      %v979 = vunpack.c.l.b16 %v486
      %v980 = vunpack.c.l.b16 %v487
      %v981 = vunpack.c.l.b16 %v488
      %v982 = vunpack.c.l.b16 %v489
      %v983 = vunpack.c.l.b16 %v490
      %v984 = vunpack.c.l.b16 %v491
      %v985 = vunpack.c.l.b16 %v492
      %v986 = vunpack.c.l.b16 %v493
      %v987 = vunpack.c.l.b16 %v494
      %v988 = vpack.c.b16 %v969, %v968
      %v989 = vpack.c.b16 %v971, %v970
      %v990 = vpack.c.b16 %v973, %v972
      %v991 = vpack.c.b16 %v975, %v974
      %v992 = vpack.c.b16 %v977, %v976
      %v993 = vpack.c.b16 %v979, %v978
      %v994 = vpack.c.b16 %v981, %v980
      %v995 = vpack.c.b16 %v983, %v982
      %v996 = vpack.c.b16 %v985, %v984
      %v997 = vpack.c.b16 %v987, %v986
      %998 = vrot.lane.b32.xlu0 %v988, 20
      %v999 = vpop.permute.xlu0 %998
      %1000 = vrot.lane.b32.xlu0 %v989, 20
      %v1001 = vpop.permute.xlu0 %1000
      %1002 = vrot.lane.b32.xlu0 %v990, 20
      %v1003 = vpop.permute.xlu0 %1002
      %1004 = vrot.lane.b32.xlu0 %v991, 20
      %v1005 = vpop.permute.xlu0 %1004
      %1006 = vrot.lane.b32.xlu0 %v992, 20
      %v1007 = vpop.permute.xlu0 %1006
      %1008 = vrot.lane.b32.xlu0 %v993, 20
      %v1009 = vpop.permute.xlu0 %1008
      %1010 = vrot.lane.b32.xlu0 %v994, 20
      %v1011 = vpop.permute.xlu0 %1010
      %1012 = vrot.lane.b32.xlu0 %v995, 20
      %v1013 = vpop.permute.xlu0 %1012
      %1014 = vrot.lane.b32.xlu0 %v996, 20
      %v1015 = vpop.permute.xlu0 %1014
      %1016 = vrot.lane.b32.xlu0 %v997, 20
      %v1017 = vpop.permute.xlu0 %1016
      %v1038 = vunpack.c.l.b16 %v518
      %v1039 = vunpack.c.l.b16 %v519
      %v1040 = vunpack.c.l.b16 %v520
      %v1041 = vunpack.c.l.b16 %v521
      %v1042 = vunpack.c.l.b16 %v522
      %v1043 = vunpack.c.l.b16 %v523
      %v1044 = vunpack.c.l.b16 %v524
      %v1045 = vunpack.c.l.b16 %v525
      %v1046 = vunpack.c.l.b16 %v526
      %v1047 = vunpack.c.l.b16 %v527
      %v1048 = vunpack.c.l.b16 %v528
      %v1049 = vunpack.c.l.b16 %v529
      %v1050 = vunpack.c.l.b16 %v530
      %v1051 = vunpack.c.l.b16 %v531
      %v1052 = vunpack.c.l.b16 %v532
      %v1053 = vunpack.c.l.b16 %v533
      %v1054 = vunpack.c.l.b16 %v534
      %v1055 = vunpack.c.l.b16 %v535
      %v1056 = vunpack.c.l.b16 %v536
      %v1057 = vunpack.c.l.b16 %v537
      %v1058 = vpack.c.b16 %v1039, %v1038
      %v1059 = vpack.c.b16 %v1041, %v1040
      %v1060 = vpack.c.b16 %v1043, %v1042
      %v1061 = vpack.c.b16 %v1045, %v1044
      %v1062 = vpack.c.b16 %v1047, %v1046
      %v1063 = vpack.c.b16 %v1049, %v1048
      %v1064 = vpack.c.b16 %v1051, %v1050
      %v1065 = vpack.c.b16 %v1053, %v1052
      %v1066 = vpack.c.b16 %v1055, %v1054
      %v1067 = vpack.c.b16 %v1057, %v1056
      %1068 = vrot.lane.b32.xlu0 %v1058, 24
      %v1069 = vpop.permute.xlu0 %1068
      %1070 = vrot.lane.b32.xlu0 %v1059, 24
      %v1071 = vpop.permute.xlu0 %1070
      %1072 = vrot.lane.b32.xlu0 %v1060, 24
      %v1073 = vpop.permute.xlu0 %1072
      %1074 = vrot.lane.b32.xlu0 %v1061, 24
      %v1075 = vpop.permute.xlu0 %1074
      %1076 = vrot.lane.b32.xlu0 %v1062, 24
      %v1077 = vpop.permute.xlu0 %1076
      %1078 = vrot.lane.b32.xlu0 %v1063, 24
      %v1079 = vpop.permute.xlu0 %1078
      %1080 = vrot.lane.b32.xlu0 %v1064, 24
      %v1081 = vpop.permute.xlu0 %1080
      %1082 = vrot.lane.b32.xlu0 %v1065, 24
      %v1083 = vpop.permute.xlu0 %1082
      %1084 = vrot.lane.b32.xlu0 %v1066, 24
      %v1085 = vpop.permute.xlu0 %1084
      %1086 = vrot.lane.b32.xlu0 %v1067, 24
      %v1087 = vpop.permute.xlu0 %1086
      %v1108 = vunpack.c.l.b16 %v558
      %v1109 = vunpack.c.l.b16 %v559
      %v1110 = vunpack.c.l.b16 %v560
      %v1111 = vunpack.c.l.b16 %v561
      %v1112 = vunpack.c.l.b16 %v562
      %v1113 = vunpack.c.l.b16 %v563
      %v1114 = vunpack.c.l.b16 %v564
      %v1115 = vunpack.c.l.b16 %v565
      %v1116 = vunpack.c.l.b16 %v566
      %v1117 = vunpack.c.l.b16 %v567
      %v1118 = vunpack.c.l.b16 %v568
      %v1119 = vunpack.c.l.b16 %v569
      %v1120 = vunpack.c.l.b16 %v570
      %v1121 = vunpack.c.l.b16 %v571
      %v1122 = vunpack.c.l.b16 %v572
      %v1123 = vunpack.c.l.b16 %v573
      %v1124 = vunpack.c.l.b16 %v574
      %v1125 = vunpack.c.l.b16 %v575
      %v1126 = vunpack.c.l.b16 %v576
      %v1127 = vunpack.c.l.b16 %v577
      %v1128 = vpack.c.b16 %v1109, %v1108
      %v1129 = vpack.c.b16 %v1111, %v1110
      %v1130 = vpack.c.b16 %v1113, %v1112
      %v1131 = vpack.c.b16 %v1115, %v1114
      %v1132 = vpack.c.b16 %v1117, %v1116
      %v1133 = vpack.c.b16 %v1119, %v1118
      %v1134 = vpack.c.b16 %v1121, %v1120
      %v1135 = vpack.c.b16 %v1123, %v1122
      %v1136 = vpack.c.b16 %v1125, %v1124
      %v1137 = vpack.c.b16 %v1127, %v1126
      %1138 = vrot.lane.b32.xlu0 %v1128, 28
      %v1139 = vpop.permute.xlu0 %1138
      %1140 = vrot.lane.b32.xlu0 %v1129, 28
      %v1141 = vpop.permute.xlu0 %1140
      %1142 = vrot.lane.b32.xlu0 %v1130, 28
      %v1143 = vpop.permute.xlu0 %1142
      %1144 = vrot.lane.b32.xlu0 %v1131, 28
      %v1145 = vpop.permute.xlu0 %1144
      %1146 = vrot.lane.b32.xlu0 %v1132, 28
      %v1147 = vpop.permute.xlu0 %1146
      %1148 = vrot.lane.b32.xlu0 %v1133, 28
      %v1149 = vpop.permute.xlu0 %1148
      %1150 = vrot.lane.b32.xlu0 %v1134, 28
      %v1151 = vpop.permute.xlu0 %1150
      %1152 = vrot.lane.b32.xlu0 %v1135, 28
      %v1153 = vpop.permute.xlu0 %1152
      %1154 = vrot.lane.b32.xlu0 %v1136, 28
      %v1155 = vpop.permute.xlu0 %1154
      %1156 = vrot.lane.b32.xlu0 %v1137, 28
      %v1157 = vpop.permute.xlu0 %1156
      %v1178 = vunpack.c.l.b16 %v598
      %v1179 = vunpack.c.l.b16 %v599
      %v1180 = vunpack.c.l.b16 %v600
      %v1181 = vunpack.c.l.b16 %v601
      %v1182 = vunpack.c.l.b16 %v602
      %v1183 = vunpack.c.l.b16 %v603
      %v1184 = vunpack.c.l.b16 %v604
      %v1185 = vunpack.c.l.b16 %v605
      %v1186 = vunpack.c.l.b16 %v606
      %v1187 = vunpack.c.l.b16 %v607
      %v1188 = vunpack.c.l.b16 %v608
      %v1189 = vunpack.c.l.b16 %v609
      %v1190 = vunpack.c.l.b16 %v610
      %v1191 = vunpack.c.l.b16 %v611
      %v1192 = vunpack.c.l.b16 %v612
      %v1193 = vunpack.c.l.b16 %v613
      %v1194 = vunpack.c.l.b16 %v614
      %v1195 = vunpack.c.l.b16 %v615
      %v1196 = vunpack.c.l.b16 %v616
      %v1197 = vunpack.c.l.b16 %v617
      %v1198 = vpack.c.b16 %v1179, %v1178
      %v1199 = vpack.c.b16 %v1181, %v1180
      %v1200 = vpack.c.b16 %v1183, %v1182
      %v1201 = vpack.c.b16 %v1185, %v1184
      %v1202 = vpack.c.b16 %v1187, %v1186
      %v1203 = vpack.c.b16 %v1189, %v1188
      %v1204 = vpack.c.b16 %v1191, %v1190
      %v1205 = vpack.c.b16 %v1193, %v1192
      %v1206 = vpack.c.b16 %v1195, %v1194
      %v1207 = vpack.c.b16 %v1197, %v1196
      %1208 = vrot.lane.b32.xlu0 %v1198, 32
      %v1209 = vpop.permute.xlu0 %1208
      %1210 = vrot.lane.b32.xlu0 %v1199, 32
      %v1211 = vpop.permute.xlu0 %1210
      %1212 = vrot.lane.b32.xlu0 %v1200, 32
      %v1213 = vpop.permute.xlu0 %1212
      %1214 = vrot.lane.b32.xlu0 %v1201, 32
      %v1215 = vpop.permute.xlu0 %1214
      %1216 = vrot.lane.b32.xlu0 %v1202, 32
      %v1217 = vpop.permute.xlu0 %1216
      %1218 = vrot.lane.b32.xlu0 %v1203, 32
      %v1219 = vpop.permute.xlu0 %1218
      %1220 = vrot.lane.b32.xlu0 %v1204, 32
      %v1221 = vpop.permute.xlu0 %1220
      %1222 = vrot.lane.b32.xlu0 %v1205, 32
      %v1223 = vpop.permute.xlu0 %1222
      %1224 = vrot.lane.b32.xlu0 %v1206, 32
      %v1225 = vpop.permute.xlu0 %1224
      %1226 = vrot.lane.b32.xlu0 %v1207, 32
      %v1227 = vpop.permute.xlu0 %1226
      %vm1228 = vcmask 31744
      %v1231 = vsel %vm1228, %v658, %v719
      %v1234 = vsel %vm1228, %v659, %v721
      %v1237 = vsel %vm1228, %v660, %v723
      %v1240 = vsel %vm1228, %v661, %v725
      %v1243 = vsel %vm1228, %v662, %v727
      %v1246 = vsel %vm1228, %v663, %v729
      %v1249 = vsel %vm1228, %v664, %v731
      %v1252 = vsel %vm1228, %v665, %v733
      %v1255 = vsel %vm1228, %v666, %v735
      %v1258 = vsel %vm1228, %v667, %v737
      %vm1259 = vcmask 64512
      %v1261 = vsel %vm1259, %v1231, %v789
      %v1263 = vsel %vm1259, %v1234, %v791
      %v1265 = vsel %vm1259, %v1237, %v793
      %v1267 = vsel %vm1259, %v1240, %v795
      %v1269 = vsel %vm1259, %v1243, %v797
      %v1271 = vsel %vm1259, %v1246, %v799
      %v1273 = vsel %vm1259, %v1249, %v801
      %v1275 = vsel %vm1259, %v1252, %v803
      %v1277 = vsel %vm1259, %v1255, %v805
      %v1279 = vsel %vm1259, %v1258, %v807
      %vm1280 = vcmask 97280
      %v1282 = vsel %vm1280, %v1261, %v859
      %v1284 = vsel %vm1280, %v1263, %v861
      %v1286 = vsel %vm1280, %v1265, %v863
      %v1288 = vsel %vm1280, %v1267, %v865
      %v1290 = vsel %vm1280, %v1269, %v867
      %v1292 = vsel %vm1280, %v1271, %v869
      %v1294 = vsel %vm1280, %v1273, %v871
      %v1296 = vsel %vm1280, %v1275, %v873
      %v1298 = vsel %vm1280, %v1277, %v875
      %v1300 = vsel %vm1280, %v1279, %v877
      %vm1301 = vcmask 130048
      %v1303 = vsel %vm1301, %v1282, %v929
      %v1305 = vsel %vm1301, %v1284, %v931
      %v1307 = vsel %vm1301, %v1286, %v933
      %v1309 = vsel %vm1301, %v1288, %v935
      %v1311 = vsel %vm1301, %v1290, %v937
      %v1313 = vsel %vm1301, %v1292, %v939
      %v1315 = vsel %vm1301, %v1294, %v941
      %v1317 = vsel %vm1301, %v1296, %v943
      %v1319 = vsel %vm1301, %v1298, %v945
      %v1321 = vsel %vm1301, %v1300, %v947
      %vm1322 = vcmask 162816
      %v1324 = vsel %vm1322, %v1303, %v999
      %v1326 = vsel %vm1322, %v1305, %v1001
      %v1328 = vsel %vm1322, %v1307, %v1003
      %v1330 = vsel %vm1322, %v1309, %v1005
      %v1332 = vsel %vm1322, %v1311, %v1007
      %v1334 = vsel %vm1322, %v1313, %v1009
      %v1336 = vsel %vm1322, %v1315, %v1011
      %v1338 = vsel %vm1322, %v1317, %v1013
      %v1340 = vsel %vm1322, %v1319, %v1015
      %v1342 = vsel %vm1322, %v1321, %v1017
      %vm1343 = vcmask 195584
      %v1345 = vsel %vm1343, %v1324, %v1069
      %v1347 = vsel %vm1343, %v1326, %v1071
      %v1349 = vsel %vm1343, %v1328, %v1073
      %v1351 = vsel %vm1343, %v1330, %v1075
      %v1353 = vsel %vm1343, %v1332, %v1077
      %v1355 = vsel %vm1343, %v1334, %v1079
      %v1357 = vsel %vm1343, %v1336, %v1081
      %v1359 = vsel %vm1343, %v1338, %v1083
      %v1361 = vsel %vm1343, %v1340, %v1085
      %v1363 = vsel %vm1343, %v1342, %v1087
      %vm1364 = vcmask 228352
      %v1366 = vsel %vm1364, %v1345, %v1139
      %v1368 = vsel %vm1364, %v1347, %v1141
      %v1370 = vsel %vm1364, %v1349, %v1143
      %v1372 = vsel %vm1364, %v1351, %v1145
      %v1374 = vsel %vm1364, %v1353, %v1147
      %v1376 = vsel %vm1364, %v1355, %v1149
      %v1378 = vsel %vm1364, %v1357, %v1151
      %v1380 = vsel %vm1364, %v1359, %v1153
      %v1382 = vsel %vm1364, %v1361, %v1155
      %v1384 = vsel %vm1364, %v1363, %v1157
      %vm1385 = vcmask 261120
      %v1387 = vsel %vm1385, %v1366, %v1209
      %v1389 = vsel %vm1385, %v1368, %v1211
      %v1391 = vsel %vm1385, %v1370, %v1213
      %v1393 = vsel %vm1385, %v1372, %v1215
      %v1395 = vsel %vm1385, %v1374, %v1217
      %v1397 = vsel %vm1385, %v1376, %v1219
      %v1399 = vsel %vm1385, %v1378, %v1221
      %v1401 = vsel %vm1385, %v1380, %v1223
      %v1403 = vsel %vm1385, %v1382, %v1225
      %v1405 = vsel %vm1385, %v1384, %v1227
      %v1406 = vld [vmem:[%s1] sm:$0xf]
      %v1407 = vld [vmem:[%s1 + $0x4] sm:$0xf]
      %v1408 = vld [vmem:[%s1 + $0x8] sm:$0xf]
      %v1409 = vld [vmem:[%s1 + $0xc] sm:$0xf]
      %v1410 = vld [vmem:[%s1 + $0x10] sm:$0x3]
      %v1411 = vld [vmem:[%s2] sm:$0x1]
      %v1413 = vperm.slane %v1411, 0
      %v1420 = vunpack.c.l.b16 %v1406
      %v1421 = vunpack.c.l.b16 %v1407
      %v1422 = vunpack.c.l.b16 %v1408
      %v1423 = vunpack.c.l.b16 %v1409
      %v1424 = vunpack.c.l.b16 %v1410
      %v1425 = vpack.c.b16 %v1421, %v1420
      %v1426 = vpack.c.b16 %v1423, %v1422
      %v1427 = vpack.c.b16 %v1424, %v1424
      %vm1430 = vcmask 293888
      %v1431 = vsel %vm1430, %v1387, 0
      %v1433 = vsel %vm1430, %v1389, 0
      %v1435 = vsel %vm1430, %v1391, 0
      %v1437 = vsel %vm1430, %v1393, 0
      %v1439 = vsel %vm1430, %v1395, 0
      %v1441 = vsel %vm1430, %v1397, 0
      %v1443 = vsel %vm1430, %v1399, 0
      %v1445 = vsel %vm1430, %v1401, 0
      %v1447 = vsel %vm1430, %v1403, 0
      %v1449 = vsel %vm1430, %v1405, 0
      %vm1451 = vcmask 1041408
      %v1453 = vsel %vm1451, %v1427, 0
      %1455 = vmatpush.bf16.msra.mxu0 0
      %1456 = vmatpush.bf16.msra.mxu0 0
      %1457 = vmatpush.bf16.msra.mxu0 0
      %1458 = vmatpush.bf16.msra.mxu0 0
      %1459 = vmatpush.bf16.msra.mxu0 0
      %1460 = vmatpush.bf16.msra.mxu0 %v1453
      %1461 = vmatpush.bf16.msra.mxu0 %v1426
      %1462 = vmatpush.bf16.msra.mxu0 %v1425
      %1463 = vmatmul.bf16.gmra.mxu0 %v1431
      %v1464 = vpop.f32.mrf.mxu0
      %v1465 = vadd.f32 %v1413, %v1464
      %v1466 = vpop.f32.mrf.mxu0
      %v1467 = vadd.f32 %v1413, %v1466
      %1468 = vmatmul.bf16.gmra.mxu0 %v1433
      %v1469 = vpop.f32.mrf.mxu0
      %v1470 = vadd.f32 %v1413, %v1469
      %v1471 = vpop.f32.mrf.mxu0
      %v1472 = vadd.f32 %v1413, %v1471
      %1473 = vmatmul.bf16.gmra.mxu0 %v1435
      %v1474 = vpop.f32.mrf.mxu0
      %v1475 = vadd.f32 %v1413, %v1474
      %v1476 = vpop.f32.mrf.mxu0
      %v1477 = vadd.f32 %v1413, %v1476
      %1478 = vmatmul.bf16.gmra.mxu0 %v1437
      %v1479 = vpop.f32.mrf.mxu0
      %v1480 = vadd.f32 %v1413, %v1479
      %v1481 = vpop.f32.mrf.mxu0
      %v1482 = vadd.f32 %v1413, %v1481
      %1483 = vmatmul.bf16.gmra.mxu0 %v1439
      %v1484 = vpop.f32.mrf.mxu0
      %v1485 = vadd.f32 %v1413, %v1484
      %v1486 = vpop.f32.mrf.mxu0
      %v1487 = vadd.f32 %v1413, %v1486
      %1488 = vmatmul.bf16.gmra.mxu0 %v1441
      %v1489 = vpop.f32.mrf.mxu0
      %v1490 = vadd.f32 %v1413, %v1489
      %v1491 = vpop.f32.mrf.mxu0
      %v1492 = vadd.f32 %v1413, %v1491
      %1493 = vmatmul.bf16.gmra.mxu0 %v1443
      %v1494 = vpop.f32.mrf.mxu0
      %v1495 = vadd.f32 %v1413, %v1494
      %v1496 = vpop.f32.mrf.mxu0
      %v1497 = vadd.f32 %v1413, %v1496
      %1498 = vmatmul.bf16.gmra.mxu0 %v1445
      %v1499 = vpop.f32.mrf.mxu0
      %v1500 = vadd.f32 %v1413, %v1499
      %v1501 = vpop.f32.mrf.mxu0
      %v1502 = vadd.f32 %v1413, %v1501
      %1503 = vmatmul.bf16.gmra.mxu0 %v1447
      %v1504 = vpop.f32.mrf.mxu0
      %v1505 = vadd.f32 %v1413, %v1504
      %v1506 = vpop.f32.mrf.mxu0
      %v1507 = vadd.f32 %v1413, %v1506
      %1508 = vmatmul.bf16.gmra.mxu0 %v1449
      %v1509 = vpop.f32.mrf.mxu0
      %v1510 = vadd.f32 %v1413, %v1509
      %v1511 = vpop.f32.mrf.mxu0
      %v1512 = vadd.f32 %v1413, %v1511
      %1513 = vdwg.mxu0
      %v1514 = vmax.f32 %v1465, 0.0
      %v1515 = vmax.f32 %v1467, 0.0
      %v1516 = vmax.f32 %v1470, 0.0
      %v1517 = vmax.f32 %v1472, 0.0
      %v1518 = vmax.f32 %v1475, 0.0
      %v1519 = vmax.f32 %v1477, 0.0
      %v1520 = vmax.f32 %v1480, 0.0
      %v1521 = vmax.f32 %v1482, 0.0
      %v1522 = vmax.f32 %v1485, 0.0
      %v1523 = vmax.f32 %v1487, 0.0
      %v1524 = vmax.f32 %v1490, 0.0
      %v1525 = vmax.f32 %v1492, 0.0
      %v1526 = vmax.f32 %v1495, 0.0
      %v1527 = vmax.f32 %v1497, 0.0
      %v1528 = vmax.f32 %v1500, 0.0
      %v1529 = vmax.f32 %v1502, 0.0
      %v1530 = vmax.f32 %v1505, 0.0
      %v1531 = vmax.f32 %v1507, 0.0
      %v1532 = vmax.f32 %v1510, 0.0
      %v1533 = vmax.f32 %v1512, 0.0
      %s1534 = ssub.s32 %s249, 1
      %v1535 = vstv %s1534
      %v1536 = vadd.s32 %v1535, 1
      %v1537 = vadd.s32 %v1535, 2
      %v1538 = vadd.s32 %v1535, 3
      %v1539 = vadd.s32 %v1535, 4
      %v1540 = vadd.s32 %v1535, 5
      %v1541 = vadd.s32 %v1535, 6
      %v1542 = vadd.s32 %v1535, 7
      %v1543 = vadd.s32 %v1535, 8
      %v1544 = vadd.s32 %v1535, 9
      %vm1545 = vcmp.ge.s32.totalorder %v1535, 0
      %vm1546 = vcmp.ge.s32.totalorder %v1536, 0
      %vm1547 = vcmp.ge.s32.totalorder %v1537, 0
      %vm1548 = vcmp.ge.s32.totalorder %v1538, 0
      %vm1549 = vcmp.ge.s32.totalorder %v1539, 0
      %vm1550 = vcmp.ge.s32.totalorder %v1540, 0
      %vm1551 = vcmp.ge.s32.totalorder %v1541, 0
      %vm1552 = vcmp.ge.s32.totalorder %v1542, 0
      %vm1553 = vcmp.ge.s32.totalorder %v1543, 0
      %vm1554 = vcmp.ge.s32.totalorder %v1544, 0
      %vm1555 = vcmp.lt.s32.totalorder %v1535, 16
      %vm1556 = vcmp.lt.s32.totalorder %v1536, 16
      %vm1557 = vcmp.lt.s32.totalorder %v1537, 16
      %vm1558 = vcmp.lt.s32.totalorder %v1538, 16
      %vm1559 = vcmp.lt.s32.totalorder %v1539, 16
      %vm1560 = vcmp.lt.s32.totalorder %v1540, 16
      %vm1561 = vcmp.lt.s32.totalorder %v1541, 16
      %vm1562 = vcmp.lt.s32.totalorder %v1542, 16
      %vm1563 = vcmp.lt.s32.totalorder %v1543, 16
      %vm1564 = vcmp.lt.s32.totalorder %v1544, 16
      %vm1565 = vmand %vm1545, %vm1555
      %vm1566 = vmand %vm1546, %vm1556
      %vm1567 = vmand %vm1547, %vm1557
      %vm1568 = vmand %vm1548, %vm1558
      %vm1569 = vmand %vm1549, %vm1559
      %vm1570 = vmand %vm1550, %vm1560
      %vm1571 = vmand %vm1551, %vm1561
      %vm1572 = vmand %vm1552, %vm1562
      %vm1573 = vmand %vm1553, %vm1563
      %vm1574 = vmand %vm1554, %vm1564
      %v1575 = vsel %vm1565, %v1514, 0.0
      %v1576 = vsel %vm1565, %v1515, 0.0
      %v1577 = vsel %vm1566, %v1516, 0.0
      %v1578 = vsel %vm1566, %v1517, 0.0
      %v1579 = vsel %vm1567, %v1518, 0.0
      %v1580 = vsel %vm1567, %v1519, 0.0
      %v1581 = vsel %vm1568, %v1520, 0.0
      %v1582 = vsel %vm1568, %v1521, 0.0
      %v1583 = vsel %vm1569, %v1522, 0.0
      %v1584 = vsel %vm1569, %v1523, 0.0
      %v1585 = vsel %vm1570, %v1524, 0.0
      %v1586 = vsel %vm1570, %v1525, 0.0
      %v1587 = vsel %vm1571, %v1526, 0.0
      %v1588 = vsel %vm1571, %v1527, 0.0
      %v1589 = vsel %vm1572, %v1528, 0.0
      %v1590 = vsel %vm1572, %v1529, 0.0
      %v1591 = vsel %vm1573, %v1530, 0.0
      %v1592 = vsel %vm1573, %v1531, 0.0
      %v1593 = vsel %vm1574, %v1532, 0.0
      %v1594 = vsel %vm1574, %v1533, 0.0
      %vm1615 = vcmask 1040384
      %v1616 = vrot.slane %v1575, 7
      %v1617 = vrot.slane %v1576, 7
      %v1618 = vsel %vm1615, %v1616, %v1617
      %v1619 = vrot.slane %v1577, 7
      %v1620 = vrot.slane %v1578, 7
      %v1621 = vsel %vm1615, %v1619, %v1620
      %v1622 = vrot.slane %v1579, 7
      %v1623 = vrot.slane %v1580, 7
      %v1624 = vsel %vm1615, %v1622, %v1623
      %v1625 = vrot.slane %v1581, 7
      %v1626 = vrot.slane %v1582, 7
      %v1627 = vsel %vm1615, %v1625, %v1626
      %v1628 = vrot.slane %v1583, 7
      %v1629 = vrot.slane %v1584, 7
      %v1630 = vsel %vm1615, %v1628, %v1629
      %v1631 = vrot.slane %v1585, 7
      %v1632 = vrot.slane %v1586, 7
      %v1633 = vsel %vm1615, %v1631, %v1632
      %v1634 = vrot.slane %v1587, 7
      %v1635 = vrot.slane %v1588, 7
      %v1636 = vsel %vm1615, %v1634, %v1635
      %v1637 = vrot.slane %v1589, 7
      %v1638 = vrot.slane %v1590, 7
      %v1639 = vsel %vm1615, %v1637, %v1638
      %v1640 = vrot.slane %v1591, 7
      %v1641 = vrot.slane %v1592, 7
      %v1642 = vsel %vm1615, %v1640, %v1641
      %v1643 = vrot.slane %v1593, 7
      %v1644 = vrot.slane %v1594, 7
      %v1645 = vsel %vm1615, %v1643, %v1644
      %v1676 = vsel %vm1615, 0.0, %v1616
      %v1677 = vsel %vm1615, 0.0, %v1619
      %v1678 = vsel %vm1615, 0.0, %v1622
      %v1679 = vsel %vm1615, 0.0, %v1625
      %v1680 = vsel %vm1615, 0.0, %v1628
      %v1681 = vsel %vm1615, 0.0, %v1631
      %v1682 = vsel %vm1615, 0.0, %v1634
      %v1683 = vsel %vm1615, 0.0, %v1637
      %v1684 = vsel %vm1615, 0.0, %v1640
      %v1685 = vsel %vm1615, 0.0, %v1643
      %v1686 = vsel %vm1615, %v1617, 0.0
      %v1687 = vsel %vm1615, %v1620, 0.0
      %v1688 = vsel %vm1615, %v1623, 0.0
      %v1689 = vsel %vm1615, %v1626, 0.0
      %v1690 = vsel %vm1615, %v1629, 0.0
      %v1691 = vsel %vm1615, %v1632, 0.0
      %v1692 = vsel %vm1615, %v1635, 0.0
      %v1693 = vsel %vm1615, %v1638, 0.0
      %v1694 = vsel %vm1615, %v1641, 0.0
      %v1695 = vsel %vm1615, %v1644, 0.0
      %v1696 = vpack.c.bf16 %v1676, %v1676
      %v1697 = vpack.c.bf16 %v1618, %v1618
      %v1698 = vpack.c.bf16 %v1677, %v1677
      %v1699 = vpack.c.bf16 %v1621, %v1621
      %v1700 = vpack.c.bf16 %v1678, %v1678
      %v1701 = vpack.c.bf16 %v1624, %v1624
      %v1702 = vpack.c.bf16 %v1679, %v1679
      %v1703 = vpack.c.bf16 %v1627, %v1627
      %v1704 = vpack.c.bf16 %v1680, %v1680
      %v1705 = vpack.c.bf16 %v1630, %v1630
      %v1706 = vpack.c.bf16 %v1681, %v1681
      %v1707 = vpack.c.bf16 %v1633, %v1633
      %v1708 = vpack.c.bf16 %v1682, %v1682
      %v1709 = vpack.c.bf16 %v1636, %v1636
      %v1710 = vpack.c.bf16 %v1683, %v1683
      %v1711 = vpack.c.bf16 %v1639, %v1639
      %vm1728 = vcmask 1046528
      %v1729 = vrot.slane %v1676, 1
      %v1730 = vrot.slane %v1618, 1
      %v1731 = vsel %vm1728, %v1729, %v1730
      %v1732 = vrot.slane %v1686, 1
      %v1733 = vsel %vm1728, %v1730, %v1732
      %v1734 = vrot.slane %v1677, 1
      %v1735 = vrot.slane %v1621, 1
      %v1736 = vsel %vm1728, %v1734, %v1735
      %v1737 = vrot.slane %v1687, 1
      %v1738 = vsel %vm1728, %v1735, %v1737
      %v1739 = vrot.slane %v1678, 1
      %v1740 = vrot.slane %v1624, 1
      %v1741 = vsel %vm1728, %v1739, %v1740
      %v1742 = vrot.slane %v1688, 1
      %v1743 = vsel %vm1728, %v1740, %v1742
      %v1744 = vrot.slane %v1679, 1
      %v1745 = vrot.slane %v1627, 1
      %v1746 = vsel %vm1728, %v1744, %v1745
      %v1747 = vrot.slane %v1689, 1
      %v1748 = vsel %vm1728, %v1745, %v1747
      %v1749 = vrot.slane %v1680, 1
      %v1750 = vrot.slane %v1630, 1
      %v1751 = vsel %vm1728, %v1749, %v1750
      %v1752 = vrot.slane %v1690, 1
      %v1753 = vsel %vm1728, %v1750, %v1752
      %v1754 = vrot.slane %v1681, 1
      %v1755 = vrot.slane %v1633, 1
      %v1756 = vsel %vm1728, %v1754, %v1755
      %v1757 = vrot.slane %v1691, 1
      %v1758 = vsel %vm1728, %v1755, %v1757
      %v1759 = vrot.slane %v1682, 1
      %v1760 = vrot.slane %v1636, 1
      %v1761 = vsel %vm1728, %v1759, %v1760
      %v1762 = vrot.slane %v1692, 1
      %v1763 = vsel %vm1728, %v1760, %v1762
      %v1764 = vrot.slane %v1683, 1
      %v1765 = vrot.slane %v1639, 1
      %v1766 = vsel %vm1728, %v1764, %v1765
      %v1767 = vrot.slane %v1693, 1
      %v1768 = vsel %vm1728, %v1765, %v1767
      %v1785 = vpack.c.bf16 %v1731, %v1731
      %v1786 = vpack.c.bf16 %v1733, %v1733
      %v1787 = vpack.c.bf16 %v1736, %v1736
      %v1788 = vpack.c.bf16 %v1738, %v1738
      %v1789 = vpack.c.bf16 %v1741, %v1741
      %v1790 = vpack.c.bf16 %v1743, %v1743
      %v1791 = vpack.c.bf16 %v1746, %v1746
      %v1792 = vpack.c.bf16 %v1748, %v1748
      %v1793 = vpack.c.bf16 %v1751, %v1751
      %v1794 = vpack.c.bf16 %v1753, %v1753
      %v1795 = vpack.c.bf16 %v1756, %v1756
      %v1796 = vpack.c.bf16 %v1758, %v1758
      %v1797 = vpack.c.bf16 %v1761, %v1761
      %v1798 = vpack.c.bf16 %v1763, %v1763
      %v1799 = vpack.c.bf16 %v1766, %v1766
      %v1800 = vpack.c.bf16 %v1768, %v1768
      %vm1801 = vcmask 1045504
      %v1802 = vrot.slane %v1676, 2
      %v1803 = vrot.slane %v1618, 2
      %v1804 = vsel %vm1801, %v1802, %v1803
      %v1805 = vrot.slane %v1686, 2
      %v1806 = vsel %vm1801, %v1803, %v1805
      %v1807 = vrot.slane %v1677, 2
      %v1808 = vrot.slane %v1621, 2
      %v1809 = vsel %vm1801, %v1807, %v1808
      %v1810 = vrot.slane %v1687, 2
      %v1811 = vsel %vm1801, %v1808, %v1810
      %v1812 = vrot.slane %v1678, 2
      %v1813 = vrot.slane %v1624, 2
      %v1814 = vsel %vm1801, %v1812, %v1813
      %v1815 = vrot.slane %v1688, 2
      %v1816 = vsel %vm1801, %v1813, %v1815
      %v1817 = vrot.slane %v1679, 2
      %v1818 = vrot.slane %v1627, 2
      %v1819 = vsel %vm1801, %v1817, %v1818
      %v1820 = vrot.slane %v1689, 2
      %v1821 = vsel %vm1801, %v1818, %v1820
      %v1822 = vrot.slane %v1680, 2
      %v1823 = vrot.slane %v1630, 2
      %v1824 = vsel %vm1801, %v1822, %v1823
      %v1825 = vrot.slane %v1690, 2
      %v1826 = vsel %vm1801, %v1823, %v1825
      %v1827 = vrot.slane %v1681, 2
      %v1828 = vrot.slane %v1633, 2
      %v1829 = vsel %vm1801, %v1827, %v1828
      %v1830 = vrot.slane %v1691, 2
      %v1831 = vsel %vm1801, %v1828, %v1830
      %v1832 = vrot.slane %v1682, 2
      %v1833 = vrot.slane %v1636, 2
      %v1834 = vsel %vm1801, %v1832, %v1833
      %v1835 = vrot.slane %v1692, 2
      %v1836 = vsel %vm1801, %v1833, %v1835
      %v1837 = vrot.slane %v1683, 2
      %v1838 = vrot.slane %v1639, 2
      %v1839 = vsel %vm1801, %v1837, %v1838
      %v1840 = vrot.slane %v1693, 2
      %v1841 = vsel %vm1801, %v1838, %v1840
      %v1858 = vpack.c.bf16 %v1804, %v1804
      %v1859 = vpack.c.bf16 %v1806, %v1806
      %v1860 = vpack.c.bf16 %v1809, %v1809
      %v1861 = vpack.c.bf16 %v1811, %v1811
      %v1862 = vpack.c.bf16 %v1814, %v1814
      %v1863 = vpack.c.bf16 %v1816, %v1816
      %v1864 = vpack.c.bf16 %v1819, %v1819
      %v1865 = vpack.c.bf16 %v1821, %v1821
      %v1866 = vpack.c.bf16 %v1824, %v1824
      %v1867 = vpack.c.bf16 %v1826, %v1826
      %v1868 = vpack.c.bf16 %v1829, %v1829
      %v1869 = vpack.c.bf16 %v1831, %v1831
      %v1870 = vpack.c.bf16 %v1834, %v1834
      %v1871 = vpack.c.bf16 %v1836, %v1836
      %v1872 = vpack.c.bf16 %v1839, %v1839
      %v1873 = vpack.c.bf16 %v1841, %v1841
      %v1874 = vpack.c.bf16 %v1684, %v1684
      %v1875 = vpack.c.bf16 %v1642, %v1642
      %v1878 = vrot.slane %v1684, 1
      %v1879 = vrot.slane %v1642, 1
      %v1880 = vsel %vm1728, %v1878, %v1879
      %v1881 = vrot.slane %v1694, 1
      %v1882 = vsel %vm1728, %v1879, %v1881
      %v1885 = vpack.c.bf16 %v1880, %v1880
      %v1886 = vpack.c.bf16 %v1882, %v1882
      %v1887 = vrot.slane %v1684, 2
      %v1888 = vrot.slane %v1642, 2
      %v1889 = vsel %vm1801, %v1887, %v1888
      %v1890 = vrot.slane %v1694, 2
      %v1891 = vsel %vm1801, %v1888, %v1890
      %v1894 = vpack.c.bf16 %v1889, %v1889
      %v1895 = vpack.c.bf16 %v1891, %v1891
      %v1896 = vpack.c.bf16 %v1685, %v1685
      %v1897 = vpack.c.bf16 %v1645, %v1645
      %v1900 = vrot.slane %v1685, 1
      %v1901 = vrot.slane %v1645, 1
      %v1902 = vsel %vm1728, %v1900, %v1901
      %v1903 = vrot.slane %v1695, 1
      %v1904 = vsel %vm1728, %v1901, %v1903
      %v1907 = vpack.c.bf16 %v1902, %v1902
      %v1908 = vpack.c.bf16 %v1904, %v1904
      %v1909 = vrot.slane %v1685, 2
      %v1910 = vrot.slane %v1645, 2
      %v1911 = vsel %vm1801, %v1909, %v1910
      %v1912 = vrot.slane %v1695, 2
      %v1913 = vsel %vm1801, %v1910, %v1912
      %v1916 = vpack.c.bf16 %v1911, %v1911
      %v1917 = vpack.c.bf16 %v1913, %v1913
      %v1934 = vunpack.c.l.b16 %v1696
      %v1935 = vunpack.c.l.b16 %v1697
      %v1936 = vunpack.c.l.b16 %v1698
      %v1937 = vunpack.c.l.b16 %v1699
      %v1938 = vunpack.c.l.b16 %v1700
      %v1939 = vunpack.c.l.b16 %v1701
      %v1940 = vunpack.c.l.b16 %v1702
      %v1941 = vunpack.c.l.b16 %v1703
      %v1942 = vunpack.c.l.b16 %v1704
      %v1943 = vunpack.c.l.b16 %v1705
      %v1944 = vunpack.c.l.b16 %v1706
      %v1945 = vunpack.c.l.b16 %v1707
      %v1946 = vunpack.c.l.b16 %v1708
      %v1947 = vunpack.c.l.b16 %v1709
      %v1948 = vunpack.c.l.b16 %v1710
      %v1949 = vunpack.c.l.b16 %v1711
      %v1950 = vpack.c.b16 %v1935, %v1934
      %v1951 = vpack.c.b16 %v1937, %v1936
      %v1952 = vpack.c.b16 %v1939, %v1938
      %v1953 = vpack.c.b16 %v1941, %v1940
      %v1954 = vpack.c.b16 %v1943, %v1942
      %v1955 = vpack.c.b16 %v1945, %v1944
      %v1956 = vpack.c.b16 %v1947, %v1946
      %v1957 = vpack.c.b16 %v1949, %v1948
      %v1974 = vunpack.c.l.b16 %v1785
      %v1975 = vunpack.c.l.b16 %v1786
      %v1976 = vunpack.c.l.b16 %v1787
      %v1977 = vunpack.c.l.b16 %v1788
      %v1978 = vunpack.c.l.b16 %v1789
      %v1979 = vunpack.c.l.b16 %v1790
      %v1980 = vunpack.c.l.b16 %v1791
      %v1981 = vunpack.c.l.b16 %v1792
      %v1982 = vunpack.c.l.b16 %v1793
      %v1983 = vunpack.c.l.b16 %v1794
      %v1984 = vunpack.c.l.b16 %v1795
      %v1985 = vunpack.c.l.b16 %v1796
      %v1986 = vunpack.c.l.b16 %v1797
      %v1987 = vunpack.c.l.b16 %v1798
      %v1988 = vunpack.c.l.b16 %v1799
      %v1989 = vunpack.c.l.b16 %v1800
      %v1990 = vpack.c.b16 %v1975, %v1974
      %v1991 = vpack.c.b16 %v1977, %v1976
      %v1992 = vpack.c.b16 %v1979, %v1978
      %v1993 = vpack.c.b16 %v1981, %v1980
      %v1994 = vpack.c.b16 %v1983, %v1982
      %v1995 = vpack.c.b16 %v1985, %v1984
      %v1996 = vpack.c.b16 %v1987, %v1986
      %v1997 = vpack.c.b16 %v1989, %v1988
      %1998 = vrot.lane.b32.xlu0 %v1990, 4
      %v1999 = vpop.permute.xlu0 %1998
      %2000 = vrot.lane.b32.xlu0 %v1991, 4
      %v2001 = vpop.permute.xlu0 %2000
      %2002 = vrot.lane.b32.xlu0 %v1992, 4
      %v2003 = vpop.permute.xlu0 %2002
      %2004 = vrot.lane.b32.xlu0 %v1993, 4
      %v2005 = vpop.permute.xlu0 %2004
      %2006 = vrot.lane.b32.xlu0 %v1994, 4
      %v2007 = vpop.permute.xlu0 %2006
      %2008 = vrot.lane.b32.xlu0 %v1995, 4
      %v2009 = vpop.permute.xlu0 %2008
      %2010 = vrot.lane.b32.xlu0 %v1996, 4
      %v2011 = vpop.permute.xlu0 %2010
      %2012 = vrot.lane.b32.xlu0 %v1997, 4
      %v2013 = vpop.permute.xlu0 %2012
      %v2030 = vunpack.c.l.b16 %v1858
      %v2031 = vunpack.c.l.b16 %v1859
      %v2032 = vunpack.c.l.b16 %v1860
      %v2033 = vunpack.c.l.b16 %v1861
      %v2034 = vunpack.c.l.b16 %v1862
      %v2035 = vunpack.c.l.b16 %v1863
      %v2036 = vunpack.c.l.b16 %v1864
      %v2037 = vunpack.c.l.b16 %v1865
      %v2038 = vunpack.c.l.b16 %v1866
      %v2039 = vunpack.c.l.b16 %v1867
      %v2040 = vunpack.c.l.b16 %v1868
      %v2041 = vunpack.c.l.b16 %v1869
      %v2042 = vunpack.c.l.b16 %v1870
      %v2043 = vunpack.c.l.b16 %v1871
      %v2044 = vunpack.c.l.b16 %v1872
      %v2045 = vunpack.c.l.b16 %v1873
      %v2046 = vpack.c.b16 %v2031, %v2030
      %v2047 = vpack.c.b16 %v2033, %v2032
      %v2048 = vpack.c.b16 %v2035, %v2034
      %v2049 = vpack.c.b16 %v2037, %v2036
      %v2050 = vpack.c.b16 %v2039, %v2038
      %v2051 = vpack.c.b16 %v2041, %v2040
      %v2052 = vpack.c.b16 %v2043, %v2042
      %v2053 = vpack.c.b16 %v2045, %v2044
      %2054 = vrot.lane.b32.xlu0 %v2046, 8
      %v2055 = vpop.permute.xlu0 %2054
      %2056 = vrot.lane.b32.xlu0 %v2047, 8
      %v2057 = vpop.permute.xlu0 %2056
      %2058 = vrot.lane.b32.xlu0 %v2048, 8
      %v2059 = vpop.permute.xlu0 %2058
      %2060 = vrot.lane.b32.xlu0 %v2049, 8
      %v2061 = vpop.permute.xlu0 %2060
      %2062 = vrot.lane.b32.xlu0 %v2050, 8
      %v2063 = vpop.permute.xlu0 %2062
      %2064 = vrot.lane.b32.xlu0 %v2051, 8
      %v2065 = vpop.permute.xlu0 %2064
      %2066 = vrot.lane.b32.xlu0 %v2052, 8
      %v2067 = vpop.permute.xlu0 %2066
      %2068 = vrot.lane.b32.xlu0 %v2053, 8
      %v2069 = vpop.permute.xlu0 %2068
      %v2072 = vunpack.c.l.b16 %v1874
      %v2073 = vunpack.c.l.b16 %v1875
      %v2074 = vpack.c.b16 %v2073, %v2072
      %2075 = vrot.lane.b32.xlu0 %v1951, 12
      %v2076 = vpop.permute.xlu0 %2075
      %2077 = vrot.lane.b32.xlu0 %v1952, 12
      %v2078 = vpop.permute.xlu0 %2077
      %2079 = vrot.lane.b32.xlu0 %v1953, 12
      %v2080 = vpop.permute.xlu0 %2079
      %2081 = vrot.lane.b32.xlu0 %v1954, 12
      %v2082 = vpop.permute.xlu0 %2081
      %2083 = vrot.lane.b32.xlu0 %v1955, 12
      %v2084 = vpop.permute.xlu0 %2083
      %2085 = vrot.lane.b32.xlu0 %v1956, 12
      %v2086 = vpop.permute.xlu0 %2085
      %2087 = vrot.lane.b32.xlu0 %v1957, 12
      %v2088 = vpop.permute.xlu0 %2087
      %2089 = vrot.lane.b32.xlu0 %v2074, 12
      %v2090 = vpop.permute.xlu0 %2089
      %v2093 = vunpack.c.l.b16 %v1885
      %v2094 = vunpack.c.l.b16 %v1886
      %v2095 = vpack.c.b16 %v2094, %v2093
      %2096 = vrot.lane.b32.xlu0 %v1991, 16
      %v2097 = vpop.permute.xlu0 %2096
      %2098 = vrot.lane.b32.xlu0 %v1992, 16
      %v2099 = vpop.permute.xlu0 %2098
      %2100 = vrot.lane.b32.xlu0 %v1993, 16
      %v2101 = vpop.permute.xlu0 %2100
      %2102 = vrot.lane.b32.xlu0 %v1994, 16
      %v2103 = vpop.permute.xlu0 %2102
      %2104 = vrot.lane.b32.xlu0 %v1995, 16
      %v2105 = vpop.permute.xlu0 %2104
      %2106 = vrot.lane.b32.xlu0 %v1996, 16
      %v2107 = vpop.permute.xlu0 %2106
      %2108 = vrot.lane.b32.xlu0 %v1997, 16
      %v2109 = vpop.permute.xlu0 %2108
      %2110 = vrot.lane.b32.xlu0 %v2095, 16
      %v2111 = vpop.permute.xlu0 %2110
      %v2114 = vunpack.c.l.b16 %v1894
      %v2115 = vunpack.c.l.b16 %v1895
      %v2116 = vpack.c.b16 %v2115, %v2114
      %2117 = vrot.lane.b32.xlu0 %v2047, 20
      %v2118 = vpop.permute.xlu0 %2117
      %2119 = vrot.lane.b32.xlu0 %v2048, 20
      %v2120 = vpop.permute.xlu0 %2119
      %2121 = vrot.lane.b32.xlu0 %v2049, 20
      %v2122 = vpop.permute.xlu0 %2121
      %2123 = vrot.lane.b32.xlu0 %v2050, 20
      %v2124 = vpop.permute.xlu0 %2123
      %2125 = vrot.lane.b32.xlu0 %v2051, 20
      %v2126 = vpop.permute.xlu0 %2125
      %2127 = vrot.lane.b32.xlu0 %v2052, 20
      %v2128 = vpop.permute.xlu0 %2127
      %2129 = vrot.lane.b32.xlu0 %v2053, 20
      %v2130 = vpop.permute.xlu0 %2129
      %2131 = vrot.lane.b32.xlu0 %v2116, 20
      %v2132 = vpop.permute.xlu0 %2131
      %v2135 = vunpack.c.l.b16 %v1896
      %v2136 = vunpack.c.l.b16 %v1897
      %v2137 = vpack.c.b16 %v2136, %v2135
      %2138 = vrot.lane.b32.xlu0 %v1952, 24
      %v2139 = vpop.permute.xlu0 %2138
      %2140 = vrot.lane.b32.xlu0 %v1953, 24
      %v2141 = vpop.permute.xlu0 %2140
      %2142 = vrot.lane.b32.xlu0 %v1954, 24
      %v2143 = vpop.permute.xlu0 %2142
      %2144 = vrot.lane.b32.xlu0 %v1955, 24
      %v2145 = vpop.permute.xlu0 %2144
      %2146 = vrot.lane.b32.xlu0 %v1956, 24
      %v2147 = vpop.permute.xlu0 %2146
      %2148 = vrot.lane.b32.xlu0 %v1957, 24
      %v2149 = vpop.permute.xlu0 %2148
      %2150 = vrot.lane.b32.xlu0 %v2074, 24
      %v2151 = vpop.permute.xlu0 %2150
      %2152 = vrot.lane.b32.xlu0 %v2137, 24
      %v2153 = vpop.permute.xlu0 %2152
      %v2156 = vunpack.c.l.b16 %v1907
      %v2157 = vunpack.c.l.b16 %v1908
      %v2158 = vpack.c.b16 %v2157, %v2156
      %2159 = vrot.lane.b32.xlu0 %v1992, 28
      %v2160 = vpop.permute.xlu0 %2159
      %2161 = vrot.lane.b32.xlu0 %v1993, 28
      %v2162 = vpop.permute.xlu0 %2161
      %2163 = vrot.lane.b32.xlu0 %v1994, 28
      %v2164 = vpop.permute.xlu0 %2163
      %2165 = vrot.lane.b32.xlu0 %v1995, 28
      %v2166 = vpop.permute.xlu0 %2165
      %2167 = vrot.lane.b32.xlu0 %v1996, 28
      %v2168 = vpop.permute.xlu0 %2167
      %2169 = vrot.lane.b32.xlu0 %v1997, 28
      %v2170 = vpop.permute.xlu0 %2169
      %2171 = vrot.lane.b32.xlu0 %v2095, 28
      %v2172 = vpop.permute.xlu0 %2171
      %2173 = vrot.lane.b32.xlu0 %v2158, 28
      %v2174 = vpop.permute.xlu0 %2173
      %v2177 = vunpack.c.l.b16 %v1916
      %v2178 = vunpack.c.l.b16 %v1917
      %v2179 = vpack.c.b16 %v2178, %v2177
      %2180 = vrot.lane.b32.xlu0 %v2048, 32
      %v2181 = vpop.permute.xlu0 %2180
      %2182 = vrot.lane.b32.xlu0 %v2049, 32
      %v2183 = vpop.permute.xlu0 %2182
      %2184 = vrot.lane.b32.xlu0 %v2050, 32
      %v2185 = vpop.permute.xlu0 %2184
      %2186 = vrot.lane.b32.xlu0 %v2051, 32
      %v2187 = vpop.permute.xlu0 %2186
      %2188 = vrot.lane.b32.xlu0 %v2052, 32
      %v2189 = vpop.permute.xlu0 %2188
      %2190 = vrot.lane.b32.xlu0 %v2053, 32
      %v2191 = vpop.permute.xlu0 %2190
      %2192 = vrot.lane.b32.xlu0 %v2116, 32
      %v2193 = vpop.permute.xlu0 %2192
      %2194 = vrot.lane.b32.xlu0 %v2179, 32
      %v2195 = vpop.permute.xlu0 %2194
      %v2198 = vsel %vm1228, %v1950, %v1999
      %v2201 = vsel %vm1228, %v1951, %v2001
      %v2204 = vsel %vm1228, %v1952, %v2003
      %v2207 = vsel %vm1228, %v1953, %v2005
      %v2210 = vsel %vm1228, %v1954, %v2007
      %v2213 = vsel %vm1228, %v1955, %v2009
      %v2216 = vsel %vm1228, %v1956, %v2011
      %v2219 = vsel %vm1228, %v1957, %v2013
      %v2221 = vsel %vm1259, %v2198, %v2055
      %v2223 = vsel %vm1259, %v2201, %v2057
      %v2225 = vsel %vm1259, %v2204, %v2059
      %v2227 = vsel %vm1259, %v2207, %v2061
      %v2229 = vsel %vm1259, %v2210, %v2063
      %v2231 = vsel %vm1259, %v2213, %v2065
      %v2233 = vsel %vm1259, %v2216, %v2067
      %v2235 = vsel %vm1259, %v2219, %v2069
      %v2237 = vsel %vm1280, %v2221, %v2076
      %v2239 = vsel %vm1280, %v2223, %v2078
      %v2241 = vsel %vm1280, %v2225, %v2080
      %v2243 = vsel %vm1280, %v2227, %v2082
      %v2245 = vsel %vm1280, %v2229, %v2084
      %v2247 = vsel %vm1280, %v2231, %v2086
      %v2249 = vsel %vm1280, %v2233, %v2088
      %v2251 = vsel %vm1280, %v2235, %v2090
      %v2253 = vsel %vm1301, %v2237, %v2097
      %v2255 = vsel %vm1301, %v2239, %v2099
      %v2257 = vsel %vm1301, %v2241, %v2101
      %v2259 = vsel %vm1301, %v2243, %v2103
      %v2261 = vsel %vm1301, %v2245, %v2105
      %v2263 = vsel %vm1301, %v2247, %v2107
      %v2265 = vsel %vm1301, %v2249, %v2109
      %v2267 = vsel %vm1301, %v2251, %v2111
      %v2269 = vsel %vm1322, %v2253, %v2118
      %v2271 = vsel %vm1322, %v2255, %v2120
      %v2273 = vsel %vm1322, %v2257, %v2122
      %v2275 = vsel %vm1322, %v2259, %v2124
      %v2277 = vsel %vm1322, %v2261, %v2126
      %v2279 = vsel %vm1322, %v2263, %v2128
      %v2281 = vsel %vm1322, %v2265, %v2130
      %v2283 = vsel %vm1322, %v2267, %v2132
      %v2285 = vsel %vm1343, %v2269, %v2139
      %v2287 = vsel %vm1343, %v2271, %v2141
      %v2289 = vsel %vm1343, %v2273, %v2143
      %v2291 = vsel %vm1343, %v2275, %v2145
      %v2293 = vsel %vm1343, %v2277, %v2147
      %v2295 = vsel %vm1343, %v2279, %v2149
      %v2297 = vsel %vm1343, %v2281, %v2151
      %v2299 = vsel %vm1343, %v2283, %v2153
      %v2301 = vsel %vm1364, %v2285, %v2160
      %v2303 = vsel %vm1364, %v2287, %v2162
      %v2305 = vsel %vm1364, %v2289, %v2164
      %v2307 = vsel %vm1364, %v2291, %v2166
      %v2309 = vsel %vm1364, %v2293, %v2168
      %v2311 = vsel %vm1364, %v2295, %v2170
      %v2313 = vsel %vm1364, %v2297, %v2172
      %v2315 = vsel %vm1364, %v2299, %v2174
      %v2317 = vsel %vm1385, %v2301, %v2181
      %v2319 = vsel %vm1385, %v2303, %v2183
      %v2321 = vsel %vm1385, %v2305, %v2185
      %v2323 = vsel %vm1385, %v2307, %v2187
      %v2325 = vsel %vm1385, %v2309, %v2189
      %v2327 = vsel %vm1385, %v2311, %v2191
      %v2329 = vsel %vm1385, %v2313, %v2193
      %v2331 = vsel %vm1385, %v2315, %v2195
      %v2332 = vld [vmem:[%s3] sm:$0xf]
      %v2333 = vld [vmem:[%s3 + $0x4] sm:$0xf]
      %v2334 = vld [vmem:[%s3 + $0x8] sm:$0xf]
      %v2335 = vld [vmem:[%s3 + $0xc] sm:$0xf]
      %v2336 = vld [vmem:[%s3 + $0x10] sm:$0x3]
      %v2337 = vld [vmem:[%s4] sm:$0x1]
      %v2339 = vperm.slane %v2337, 0
      %v2346 = vunpack.c.l.b16 %v2332
      %v2347 = vunpack.c.l.b16 %v2333
      %v2348 = vunpack.c.l.b16 %v2334
      %v2349 = vunpack.c.l.b16 %v2335
      %v2350 = vunpack.c.l.b16 %v2336
      %v2351 = vpack.c.b16 %v2347, %v2346
      %v2352 = vpack.c.b16 %v2349, %v2348
      %v2353 = vpack.c.b16 %v2350, %v2350
      %v2356 = vsel %vm1430, %v2317, 0
      %v2358 = vsel %vm1430, %v2319, 0
      %v2360 = vsel %vm1430, %v2321, 0
      %v2362 = vsel %vm1430, %v2323, 0
      %v2364 = vsel %vm1430, %v2325, 0
      %v2366 = vsel %vm1430, %v2327, 0
      %v2368 = vsel %vm1430, %v2329, 0
      %v2370 = vsel %vm1430, %v2331, 0
      %v2373 = vsel %vm1451, %v2353, 0
      %2375 = vmatpush.bf16.msra.mxu0 0
      %2376 = vmatpush.bf16.msra.mxu0 0
      %2377 = vmatpush.bf16.msra.mxu0 0
      %2378 = vmatpush.bf16.msra.mxu0 0
      %2379 = vmatpush.bf16.msra.mxu0 0
      %2380 = vmatpush.bf16.msra.mxu0 %v2373
      %2381 = vmatpush.bf16.msra.mxu0 %v2352
      %2382 = vmatpush.bf16.msra.mxu0 %v2351
      %2383 = vmatmul.bf16.gmra.mxu0 %v2356
      %v2384 = vpop.f32.mrf.mxu0
      %v2385 = vadd.f32 %v2339, %v2384
      %v2386 = vpop.f32.mrf.mxu0
      %v2387 = vadd.f32 %v2339, %v2386
      %2388 = vmatmul.bf16.gmra.mxu0 %v2358
      %v2389 = vpop.f32.mrf.mxu0
      %v2390 = vadd.f32 %v2339, %v2389
      %v2391 = vpop.f32.mrf.mxu0
      %v2392 = vadd.f32 %v2339, %v2391
      %2393 = vmatmul.bf16.gmra.mxu0 %v2360
      %v2394 = vpop.f32.mrf.mxu0
      %v2395 = vadd.f32 %v2339, %v2394
      %v2396 = vpop.f32.mrf.mxu0
      %v2397 = vadd.f32 %v2339, %v2396
      %2398 = vmatmul.bf16.gmra.mxu0 %v2362
      %v2399 = vpop.f32.mrf.mxu0
      %v2400 = vadd.f32 %v2339, %v2399
      %v2401 = vpop.f32.mrf.mxu0
      %v2402 = vadd.f32 %v2339, %v2401
      %2403 = vmatmul.bf16.gmra.mxu0 %v2364
      %v2404 = vpop.f32.mrf.mxu0
      %v2405 = vadd.f32 %v2339, %v2404
      %v2406 = vpop.f32.mrf.mxu0
      %v2407 = vadd.f32 %v2339, %v2406
      %2408 = vmatmul.bf16.gmra.mxu0 %v2366
      %v2409 = vpop.f32.mrf.mxu0
      %v2410 = vadd.f32 %v2339, %v2409
      %v2411 = vpop.f32.mrf.mxu0
      %v2412 = vadd.f32 %v2339, %v2411
      %2413 = vmatmul.bf16.gmra.mxu0 %v2368
      %v2414 = vpop.f32.mrf.mxu0
      %v2415 = vadd.f32 %v2339, %v2414
      %v2416 = vpop.f32.mrf.mxu0
      %v2417 = vadd.f32 %v2339, %v2416
      %2418 = vmatmul.bf16.gmra.mxu0 %v2370
      %v2419 = vpop.f32.mrf.mxu0
      %v2420 = vadd.f32 %v2339, %v2419
      %v2421 = vpop.f32.mrf.mxu0
      %v2422 = vadd.f32 %v2339, %v2421
      %2423 = vdwg.mxu0
      %v2424 = vld [vmem:[%s497 + $0x1] sm:$0xff]
      %v2425 = vld [vmem:[%s497 + $0x9] sm:$0xff]
      %v2426 = vld [vmem:[%s497 + $0x19] sm:$0xff]
      %v2427 = vld [vmem:[%s497 + $0x21] sm:$0xff]
      %v2428 = vld [vmem:[%s497 + $0x31] sm:$0xff]
      %v2429 = vld [vmem:[%s497 + $0x39] sm:$0xff]
      %v2430 = vld [vmem:[%s497 + $0x49] sm:$0xff]
      %v2431 = vld [vmem:[%s497 + $0x51] sm:$0xff]
      %v2432 = vld [vmem:[%s497 + $0x61] sm:$0xff]
      %v2433 = vld [vmem:[%s497 + $0x69] sm:$0xff]
      %v2434 = vld [vmem:[%s497 + $0x79] sm:$0xff]
      %v2435 = vld [vmem:[%s497 + $0x81] sm:$0xff]
      %v2436 = vld [vmem:[%s497 + $0x91] sm:$0xff]
      %v2437 = vld [vmem:[%s497 + $0x99] sm:$0xff]
      %v2438 = vld [vmem:[%s497 + $0xa9] sm:$0xff]
      %v2439 = vld [vmem:[%s497 + $0xb1] sm:$0xff]
      %v2440 = vadd.f32 %v2385, %v2424
      %v2441 = vadd.f32 %v2387, %v2425
      %v2442 = vadd.f32 %v2390, %v2426
      %v2443 = vadd.f32 %v2392, %v2427
      %v2444 = vadd.f32 %v2395, %v2428
      %v2445 = vadd.f32 %v2397, %v2429
      %v2446 = vadd.f32 %v2400, %v2430
      %v2447 = vadd.f32 %v2402, %v2431
      %v2448 = vadd.f32 %v2405, %v2432
      %v2449 = vadd.f32 %v2407, %v2433
      %v2450 = vadd.f32 %v2410, %v2434
      %v2451 = vadd.f32 %v2412, %v2435
      %v2452 = vadd.f32 %v2415, %v2436
      %v2453 = vadd.f32 %v2417, %v2437
      %v2454 = vadd.f32 %v2420, %v2438
      %v2455 = vadd.f32 %v2422, %v2439
      %2456 = vst.msk [vmem:[%s246] sm:$0xff] %vm1228, %v2440
      %2457 = vst.msk [vmem:[%s246 + $0x8] sm:$0xff] %vm1228, %v2441
      %2458 = vst.msk [vmem:[%s246 + $0x10] sm:$0xff] %vm1228, %v2442
      %2459 = vst.msk [vmem:[%s246 + $0x18] sm:$0xff] %vm1228, %v2443
      %2460 = vst.msk [vmem:[%s246 + $0x20] sm:$0xff] %vm1228, %v2444
      %2461 = vst.msk [vmem:[%s246 + $0x28] sm:$0xff] %vm1228, %v2445
      %2462 = vst.msk [vmem:[%s246 + $0x30] sm:$0xff] %vm1228, %v2446
      %2463 = vst.msk [vmem:[%s246 + $0x38] sm:$0xff] %vm1228, %v2447
      %2464 = vst.msk [vmem:[%s246 + $0x40] sm:$0xff] %vm1228, %v2448
      %2465 = vst.msk [vmem:[%s246 + $0x48] sm:$0xff] %vm1228, %v2449
      %2466 = vst.msk [vmem:[%s246 + $0x50] sm:$0xff] %vm1228, %v2450
      %2467 = vst.msk [vmem:[%s246 + $0x58] sm:$0xff] %vm1228, %v2451
      %2468 = vst.msk [vmem:[%s246 + $0x60] sm:$0xff] %vm1228, %v2452
      %2469 = vst.msk [vmem:[%s246 + $0x68] sm:$0xff] %vm1228, %v2453
      %2470 = vst.msk [vmem:[%s246 + $0x70] sm:$0xff] %vm1228, %v2454
      %2471 = vst.msk [vmem:[%s246 + $0x78] sm:$0xff] %vm1228, %v2455
      %s2472 = smul.u32 16, %s21
      %p2473 = scmp.lt.s32.totalorder %s20, 1
      %s2474 = scalar_select %p2473, %s20, 1
      %p2475 = scmp.lt.s32.totalorder %s2472, 31
      %s2476 = scalar_select %p2475, %s2472, 31
      %s2477 = smul.addr %s2474, 32
      %s2478 = sadd.s32 %s2476, %s2477
      %s2479 = smul.addr %s2478, 8
      %s2480 = scalar_lea.vmem %s5, %s2479
      // Predicated region
      $region41: #{tpu_custom_call.1} parent=39 // pred_check
        %p2481 = pneg %p158
      $region42: #{tpu_custom_call.1} parent=39 // pred_check_branch
        %2483 = sbr.rel (%p2481) target = $region44
      $region43: #{tpu_custom_call.1} parent=39 // pred_region
        %s2484 = smul.u32 16, %s21
      $region44: #{tpu_custom_call.1} parent=39 // pred_fallthru
        _
    $region40: #{tpu_custom_call.1} parent=5 // pred_fallthru
      _
    %p2485 = scmp.le.s32.totalorder 2, %s11
    // Predicated region
    $region45: #{tpu_custom_call.1} parent=5 // pred_check
      %p2486 = pneg %p2485
    $region46: #{tpu_custom_call.1} parent=5 // pred_check_branch
      %2488 = sbr.rel (%p2486) target = $region48
    $region47: #{tpu_custom_call.1} parent=5 // pred_region
      %s2489 = ssub.s32 %s11, 2
      // Predicated region
      $region49: #{tpu_custom_call.1} parent=47 // pred_check
        %p2490 = pneg %p164
      $region50: #{tpu_custom_call.1} parent=47 // pred_check_branch
        %2492 = sbr.rel (%p2490) target = $region52
      $region51: #{tpu_custom_call.1} parent=47 // pred_region
        %s2493 = smul.u32 16, %s23
        %p2494 = scmp.lt.s32.totalorder %s22, 1
        %s2495 = scalar_select %p2494, %s22, 1
        %p2496 = scmp.lt.s32.totalorder %s2493, 31
        %s2497 = scalar_select %p2496, %s2493, 31
        %s2498 = smul.addr %s2495, 32
        %s2499 = sadd.s32 %s2497, %s2498
        %s2500 = smul.addr %s2499, 8
        %s2501 = scalar_lea.vmem %s5, %s2500
      $region52: #{tpu_custom_call.1} parent=47 // pred_fallthru
        _
    $region48: #{tpu_custom_call.1} parent=5 // pred_fallthru
      _
  $region6: #{tpu_custom_call.1} parent=0 // loop_footer
    %s15 = sadd.s32 1, %s11
  $region7: #{tpu_custom_call.1} parent=0 // loop_footer_branch
    %10 = sbr.rel target = $region3
  $region8: #{tpu_custom_call.1} parent=0 // loop_exit
    _

</llo_original>
